<compile_context>
chip_gen: v5e
topology: v5e:2x2
jax: 0.10.0
libtpu: 0.0.40
codegen_flags: <defaults>
</compile_context>

<pallas_src>
import jax
import jax.numpy as jnp
from jax import lax
from jax.experimental import pallas as pl
from jax.experimental.pallas import tpu as pltpu


def _round_up(x, m):
    return ((x + m - 1) // m) * m


def fused_lstm_kernel(x_ref, wih_ref, whh_ref, b_ref, out_ref, act_scr, xp_scr):
    """All LSTM layers, one layer per grid step.

    x_ref   : (seq, Dp)      f32  layer-0 input, zero-padded to Dp lanes
    wih_ref : (Dp, 4*Hp)     f32  this layer's input->hidden weights (padded, gate order [i,f,o,g])
    whh_ref : (Hp, 4*Hp)     f32  this layer's hidden->hidden weights (padded)
    b_ref   : (1, 4*Hp)      f32  fused bias (b_ih + b_hh), padded
    out_ref : (seq, Hp)      f32  final-layer hidden states (written on last layer)
    act_scr : (seq, Dp)      f32  persistent inter-layer activation buffer (VMEM)
    xp_scr  : (seq, 4*Hp)    f32  precomputed input projection for this layer (VMEM)
    """
    layer = pl.program_id(0)
    num_layers = pl.num_programs(0)
    seq = act_scr.shape[0]
    Hp = whh_ref.shape[0]

    # Seed the activation buffer with the (padded) sentence on the first layer.
    @pl.when(layer == 0)
    def _():
        act_scr[...] = x_ref[...]

    # One big MXU matmul: input projection + bias for every timestep of this layer.
    # (Zero-padded rows of wih make stale columns of act_scr harmless.)
    xp_scr[...] = (
        jnp.dot(act_scr[...], wih_ref[...], preferred_element_type=jnp.float32)
        + b_ref[...]
    )

    whh = whh_ref[...]

    def step(t, carry):
        h, c = carry  # each (1, Hp) f32
        gates = xp_scr[pl.ds(t, 1), :] + jnp.dot(
            h, whh, preferred_element_type=jnp.float32
        )
        # Packed gate order [i, f, o | g]: one sigmoid, one tanh.
        sig = jax.nn.sigmoid(gates[:, : 3 * Hp])
        i = sig[:, 0 * Hp:1 * Hp]
        f = sig[:, 1 * Hp:2 * Hp]
        o = sig[:, 2 * Hp:3 * Hp]
        g = jnp.tanh(gates[:, 3 * Hp:])
        c_new = f * c + i * g
        h_new = o * jnp.tanh(c_new)
        # Lane-aligned (Hp multiple of 128) store; feeds the next layer.
        act_scr[pl.ds(t, 1), pl.ds(0, Hp)] = h_new
        return (h_new, c_new)

    h0 = jnp.zeros((1, Hp), jnp.float32)
    c0 = jnp.zeros((1, Hp), jnp.float32)
    # seq is static -> full unroll for LLO scheduling visibility across steps.
    lax.fori_loop(0, seq, step, (h0, c0), unroll=True)

    # Only the last layer materializes the output (single lane-dense bulk copy).
    @pl.when(layer == num_layers - 1)
    def _():
        out_ref[...] = act_scr[:, pl.ds(0, Hp)]


def lstm_forward_fused(x_padded, wih_stack, whh_stack, b_stack):
    num_layers, Dp, four_Hp = wih_stack.shape
    Hp = four_Hp // 4
    seq = x_padded.shape[0]
    return pl.pallas_call(
        fused_lstm_kernel,
        out_shape=jax.ShapeDtypeStruct((seq, Hp), jnp.float32),
        grid_spec=pltpu.PrefetchScalarGridSpec(
            num_scalar_prefetch=0,
            grid=(num_layers,),
            in_specs=[
                pl.BlockSpec((seq, Dp), lambda l: (0, 0)),
                pl.BlockSpec((None, Dp, 4 * Hp), lambda l: (l, 0, 0)),
                pl.BlockSpec((None, Hp, 4 * Hp), lambda l: (l, 0, 0)),
                pl.BlockSpec((None, 1, 4 * Hp), lambda l: (l, 0, 0)),
            ],
            out_specs=pl.BlockSpec((seq, Hp), lambda l: (0, 0)),
            scratch_shapes=[
                pltpu.VMEM((seq, Dp), jnp.float32),       # inter-layer activations
                pltpu.VMEM((seq, 4 * Hp), jnp.float32),   # input projection
            ],
        ),
        compiler_params=pltpu.CompilerParams(
            dimension_semantics=("arbitrary",),
        ),
    )(x_padded, wih_stack, whh_stack, b_stack)


def init_bilstm_params(key, embedding_dim, hidden_dim, num_layers):
    """Deterministic init matching nn.LSTM parameter shapes (uniform +-1/sqrt(H))."""
    params = []
    k = 1.0 / jnp.sqrt(hidden_dim)
    for layer in range(num_layers):
        in_dim = embedding_dim if layer == 0 else hidden_dim
        key, k1, k2, k3, k4 = jax.random.split(key, 5)
        w_ih = jax.random.uniform(k1, (4 * hidden_dim, in_dim), jnp.float32, -k, k)
        w_hh = jax.random.uniform(k2, (4 * hidden_dim, hidden_dim), jnp.float32, -k, k)
        b_ih = jax.random.uniform(k3, (4 * hidden_dim,), jnp.float32, -k, k)
        b_hh = jax.random.uniform(k4, (4 * hidden_dim,), jnp.float32, -k, k)
        params.append((w_ih, w_hh, b_ih, b_hh))
    return params


def pack_lstm_params(params, embedding_dim, hidden_dim):
    """One-time packing (done at init, not per forward):
       - transpose weights to (in_dim, 4H) / (H, 4H) layout,
       - fuse b_ih + b_hh,
       - reorder gates from PyTorch [i, f, g, o] to [i, f, o, g],
       - pad every gate block to Hp = round_up(H, 128) lanes and the input dim
         to Dp lanes, stacking all layers along a leading layer axis."""
    H = hidden_dim
    Hp = _round_up(H, 128)
    Dp = max(_round_up(embedding_dim, 128), Hp)
    L = len(params)
    wih = jnp.zeros((L, Dp, 4 * Hp), jnp.float32)
    whh = jnp.zeros((L, Hp, 4 * Hp), jnp.float32)
    bias = jnp.zeros((L, 1, 4 * Hp), jnp.float32)
    gate_src = (0, 1, 3, 2)  # packed slot -> PyTorch gate index ([i,f,o,g] <- [i,f,g,o])
    for l, (w_ih, w_hh, b_ih, b_hh) in enumerate(params):
        in_dim = w_ih.shape[1]
        b = b_ih + b_hh
        for dst, src in enumerate(gate_src):
            wih = wih.at[l, :in_dim, dst * Hp:dst * Hp + H].set(
                w_ih[src * H:(src + 1) * H, :].T)
            whh = whh.at[l, :H, dst * Hp:dst * Hp + H].set(
                w_hh[src * H:(src + 1) * H, :].T)
            bias = bias.at[l, 0, dst * Hp:dst * Hp + H].set(b[src * H:(src + 1) * H])
    return wih, whh, bias, Hp, Dp


def bilstm_forward(sentence, packed_params, hidden_dim):
    """Equivalent of BiLstm.forward: returns lstm_out (seq, hidden_dim)."""
    wih, whh, bias, Hp, Dp = packed_params
    seq, emb = sentence.shape
    x_padded = jnp.zeros((seq, Dp), jnp.float32).at[:, :emb].set(
        sentence.astype(jnp.float32))
    out_padded = lstm_forward_fused(x_padded, wih, whh, bias)
    return out_padded[:, :hidden_dim]


def bilstm_forward_ref(sentence, params):
    """Pure-JAX reference of the same PyTorch LSTM semantics (for verification)."""
    x = sentence.astype(jnp.float32)
    for (w_ih, w_hh, b_ih, b_hh) in params:
        H = w_hh.shape[1]
        seq = x.shape[0]
        h = jnp.zeros((H,), jnp.float32)
        c = jnp.zeros((H,), jnp.float32)
        outs = []
        for t in range(seq):
            g = w_ih @ x[t] + b_ih + w_hh @ h + b_hh
            i = jax.nn.sigmoid(g[0 * H:1 * H])
            f = jax.nn.sigmoid(g[1 * H:2 * H])
            gg = jnp.tanh(g[2 * H:3 * H])
            o = jax.nn.sigmoid(g[3 * H:4 * H])
            c = f * c + i * gg
            h = o * jnp.tanh(c)
            outs.append(h)
        x = jnp.stack(outs, axis=0)
    return x


if __name__ == "__main__":
    embedding_dim = 16
    hidden_dim = 32
    num_layers = 2
    seq_len = 8

    key = jax.random.PRNGKey(0)
    key, pkey, xkey = jax.random.split(key, 3)

    params = init_bilstm_params(pkey, embedding_dim, hidden_dim, num_layers)
    packed = pack_lstm_params(params, embedding_dim, hidden_dim)

    # "sentence" = stack of word embeddings -> (seq_len, embedding_dim)
    sentence = jax.random.normal(xkey, (seq_len, embedding_dim), jnp.float32)

    lstm_out = bilstm_forward(sentence, packed, hidden_dim)
    lstm_out = jax.block_until_ready(lstm_out)

    ref = bilstm_forward_ref(sentence, params)
    assert lstm_out.shape == (seq_len, hidden_dim)
    assert jnp.allclose(lstm_out, ref, rtol=1e-5, atol=1e-5)

    print("KERNEL_OK")
</pallas_src>

<mosaic_0001>
module attributes {stable_mosaic.version = 11 : i64} {
  func.func @fused_lstm_kernel(%arg0: i32, %arg1: memref<8x128xf32, #tpu.memory_space<vmem>>, %arg2: memref<1x128x512xf32, #tpu.memory_space<vmem>>, %arg3: memref<1x128x512xf32, #tpu.memory_space<vmem>>, %arg4: memref<1x1x512xf32, #tpu.memory_space<vmem>>, %arg5: memref<8x128xf32, #tpu.memory_space<vmem>>, %arg6: memref<8x128xf32, #tpu.memory_space<vmem>>, %arg7: memref<8x512xf32, #tpu.memory_space<vmem>>) attributes {dimension_semantics = [#tpu.dimension_semantics<arbitrary>], iteration_bounds = array<i64: 2>, scalar_prefetch = 0 : i64, scratch_operands = 2 : i64, tpu.core_type = #tpu.core_type<tc>, window_params = [{pipeline_mode = #tpu.pipeline_mode<synchronous>, transform_indices = @transform_0, window_bounds = array<i64: 8, 128>}, {transform_indices = @transform_1, window_bounds = array<i64: 1, 128, 512>}, {transform_indices = @transform_2, window_bounds = array<i64: 1, 128, 512>}, {transform_indices = @transform_3, window_bounds = array<i64: 1, 1, 512>}, {pipeline_mode = #tpu.pipeline_mode<synchronous>, transform_indices = @transform_4, window_bounds = array<i64: 8, 128>}]} {
    %c0_i32 = arith.constant 0 : i32
    %0 = arith.cmpi eq, %arg0, %c0_i32 : i32
    %1 = arith.extui %0 : i1 to i32
    %c0_i32_0 = arith.constant 0 : i32
    %2 = arith.cmpi ne, %1, %c0_i32_0 : i32
    scf.if %2 {
      %c0_50 = arith.constant 0 : index
      %c0_51 = arith.constant 0 : index
      %195 = vector.load %arg1[%c0_50, %c0_51] : memref<8x128xf32, #tpu.memory_space<vmem>>, vector<8x128xf32>
      %c0_52 = arith.constant 0 : index
      %c0_53 = arith.constant 0 : index
      %196 = vector.load %arg6[%c0_52, %c0_53] : memref<8x128xf32, #tpu.memory_space<vmem>>, vector<8x128xf32>
      tpu.vector_store %arg6[%c0_52, %c0_53], %195 {strides = array<i32>} : memref<8x128xf32, #tpu.memory_space<vmem>>, vector<8x128xf32>,
    } else {
    }
    %c0 = arith.constant 0 : index
    %c0_1 = arith.constant 0 : index
    %3 = vector.load %arg6[%c0, %c0_1] : memref<8x128xf32, #tpu.memory_space<vmem>>, vector<8x128xf32>
    %c0_2 = arith.constant 0 : index
    %c0_3 = arith.constant 0 : index
    %c0_4 = arith.constant 0 : index
    %4 = vector.load %arg2[%c0_2, %c0_3, %c0_4] : memref<1x128x512xf32, #tpu.memory_space<vmem>>, vector<1x128x512xf32>
    %5 = vector.shape_cast %4 : vector<1x128x512xf32> to vector<128x512xf32>
    %cst = arith.constant dense<0.000000e+00> : vector<8x512xf32>
    %6 = tpu.matmul %3, %5, %cst {dimension_numbers = #tpu.dot_dimension_numbers<[1], [0], [0], [1], [0, 0, 1, 1], [], []>} : vector<8x128xf32>, vector<128x512xf32>, vector<8x512xf32> -> vector<8x512xf32>
    %c0_5 = arith.constant 0 : index
    %c0_6 = arith.constant 0 : index
    %c0_7 = arith.constant 0 : index
    %7 = vector.load %arg4[%c0_5, %c0_6, %c0_7] : memref<1x1x512xf32, #tpu.memory_space<vmem>>, vector<1x1x512xf32>
    %8 = vector.shape_cast %7 : vector<1x1x512xf32> to vector<1x512xf32>
    %9 = vector.broadcast %8 : vector<1x512xf32> to vector<8x512xf32>
    %10 = arith.addf %6, %9 : vector<8x512xf32>
    %c0_8 = arith.constant 0 : index
    %c0_9 = arith.constant 0 : index
    %11 = vector.load %arg7[%c0_8, %c0_9] : memref<8x512xf32, #tpu.memory_space<vmem>>, vector<8x512xf32>
    tpu.vector_store %arg7[%c0_8, %c0_9], %10 {strides = array<i32>} : memref<8x512xf32, #tpu.memory_space<vmem>>, vector<8x512xf32>,
    %c0_10 = arith.constant 0 : index
    %c0_11 = arith.constant 0 : index
    %c0_12 = arith.constant 0 : index
    %12 = vector.load %arg3[%c0_10, %c0_11, %c0_12] : memref<1x128x512xf32, #tpu.memory_space<vmem>>, vector<1x128x512xf32>
    %13 = vector.shape_cast %12 : vector<1x128x512xf32> to vector<128x512xf32>
    %cst_13 = arith.constant 0.000000e+00 : f32
    %14 = vector.broadcast %cst_13 : f32 to vector<1x128xf32>
    %cst_14 = arith.constant 0.000000e+00 : f32
    %15 = vector.broadcast %cst_14 : f32 to vector<1x128xf32>
    %c0_i32_15 = arith.constant 0 : i32
    %16 = arith.index_cast %c0_i32_15 : i32 to index
    %c0_16 = arith.constant 0 : index
    %17 = vector.load %arg7[%16, %c0_16] : memref<8x512xf32, #tpu.memory_space<vmem>>, vector<1x512xf32>
    %cst_17 = arith.constant dense<0.000000e+00> : vector<1x512xf32>
    %18 = tpu.matmul %14, %13, %cst_17 {dimension_numbers = #tpu.dot_dimension_numbers<[1], [0], [0], [1], [0, 0, 1, 1], [], []>} : vector<1x128xf32>, vector<128x512xf32>, vector<1x512xf32> -> vector<1x512xf32>
    %19 = arith.addf %17, %18 : vector<1x512xf32>
    %20 = vector.extract_strided_slice %19 {offsets = [0, 0], sizes = [1, 384], strides = [1, 1]} : vector<1x512xf32> to vector<1x384xf32>
    %21 = arith.negf %20 : vector<1x384xf32>
    %22 = math.exp %21 : vector<1x384xf32>
    %cst_18 = arith.constant 1.000000e+00 : f32
    %23 = vector.broadcast %cst_18 : f32 to vector<1x384xf32>
    %24 = arith.addf %23, %22 : vector<1x384xf32>
    %25 = arith.divf %23, %24 : vector<1x384xf32>
    %26 = vector.extract_strided_slice %25 {offsets = [0, 0], sizes = [1, 128], strides = [1, 1]} : vector<1x384xf32> to vector<1x128xf32>
    %27 = vector.extract_strided_slice %25 {offsets = [0, 128], sizes = [1, 128], strides = [1, 1]} : vector<1x384xf32> to vector<1x128xf32>
    %28 = vector.extract_strided_slice %25 {offsets = [0, 256], sizes = [1, 128], strides = [1, 1]} : vector<1x384xf32> to vector<1x128xf32>
    %29 = vector.extract_strided_slice %19 {offsets = [0, 384], sizes = [1, 128], strides = [1, 1]} : vector<1x512xf32> to vector<1x128xf32>
    %30 = math.tanh %29 : vector<1x128xf32>
    %31 = arith.mulf %27, %15 : vector<1x128xf32>
    %32 = arith.mulf %26, %30 : vector<1x128xf32>
    %33 = arith.addf %31, %32 : vector<1x128xf32>
    %34 = math.tanh %33 : vector<1x128xf32>
    %35 = arith.mulf %28, %34 : vector<1x128xf32>
    %36 = arith.index_cast %c0_i32_15 : i32 to index
    %c0_19 = arith.constant 0 : index
    %37 = vector.load %arg6[%36, %c0_19] : memref<8x128xf32, #tpu.memory_space<vmem>>, vector<1x128xf32>
    tpu.vector_store %arg6[%36, %c0_19], %35 {strides = array<i32>} : memref<8x128xf32, #tpu.memory_space<vmem>>, vector<1x128xf32>,
    %c1_i32 = arith.constant 1 : i32
    %38 = arith.index_cast %c1_i32 : i32 to index
    %c0_20 = arith.constant 0 : index
    %39 = vector.load %arg7[%38, %c0_20] : memref<8x512xf32, #tpu.memory_space<vmem>>, vector<1x512xf32>
    %cst_21 = arith.constant dense<0.000000e+00> : vector<1x512xf32>
    %40 = tpu.matmul %35, %13, %cst_21 {dimension_numbers = #tpu.dot_dimension_numbers<[1], [0], [0], [1], [0, 0, 1, 1], [], []>} : vector<1x128xf32>, vector<128x512xf32>, vector<1x512xf32> -> vector<1x512xf32>
    %41 = arith.addf %39, %40 : vector<1x512xf32>
    %42 = vector.extract_strided_slice %41 {offsets = [0, 0], sizes = [1, 384], strides = [1, 1]} : vector<1x512xf32> to vector<1x384xf32>
    %43 = arith.negf %42 : vector<1x384xf32>
    %44 = math.exp %43 : vector<1x384xf32>
    %cst_22 = arith.constant 1.000000e+00 : f32
    %45 = vector.broadcast %cst_22 : f32 to vector<1x384xf32>
    %46 = arith.addf %45, %44 : vector<1x384xf32>
    %47 = arith.divf %45, %46 : vector<1x384xf32>
    %48 = vector.extract_strided_slice %47 {offsets = [0, 0], sizes = [1, 128], strides = [1, 1]} : vector<1x384xf32> to vector<1x128xf32>
    %49 = vector.extract_strided_slice %47 {offsets = [0, 128], sizes = [1, 128], strides = [1, 1]} : vector<1x384xf32> to vector<1x128xf32>
    %50 = vector.extract_strided_slice %47 {offsets = [0, 256], sizes = [1, 128], strides = [1, 1]} : vector<1x384xf32> to vector<1x128xf32>
    %51 = vector.extract_strided_slice %41 {offsets = [0, 384], sizes = [1, 128], strides = [1, 1]} : vector<1x512xf32> to vector<1x128xf32>
    %52 = math.tanh %51 : vector<1x128xf32>
    %53 = arith.mulf %49, %33 : vector<1x128xf32>
    %54 = arith.mulf %48, %52 : vector<1x128xf32>
    %55 = arith.addf %53, %54 : vector<1x128xf32>
    %56 = math.tanh %55 : vector<1x128xf32>
    %57 = arith.mulf %50, %56 : vector<1x128xf32>
    %58 = arith.index_cast %c1_i32 : i32 to index
    %c0_23 = arith.constant 0 : index
    %59 = vector.load %arg6[%58, %c0_23] : memref<8x128xf32, #tpu.memory_space<vmem>>, vector<1x128xf32>
    tpu.vector_store %arg6[%58, %c0_23], %57 {strides = array<i32>} : memref<8x128xf32, #tpu.memory_space<vmem>>, vector<1x128xf32>,
    %c2_i32 = arith.constant 2 : i32
    %60 = arith.index_cast %c2_i32 : i32 to index
    %c0_24 = arith.constant 0 : index
    %61 = vector.load %arg7[%60, %c0_24] : memref<8x512xf32, #tpu.memory_space<vmem>>, vector<1x512xf32>
    %cst_25 = arith.constant dense<0.000000e+00> : vector<1x512xf32>
    %62 = tpu.matmul %57, %13, %cst_25 {dimension_numbers = #tpu.dot_dimension_numbers<[1], [0], [0], [1], [0, 0, 1, 1], [], []>} : vector<1x128xf32>, vector<128x512xf32>, vector<1x512xf32> -> vector<1x512xf32>
    %63 = arith.addf %61, %62 : vector<1x512xf32>
    %64 = vector.extract_strided_slice %63 {offsets = [0, 0], sizes = [1, 384], strides = [1, 1]} : vector<1x512xf32> to vector<1x384xf32>
    %65 = arith.negf %64 : vector<1x384xf32>
    %66 = math.exp %65 : vector<1x384xf32>
    %cst_26 = arith.constant 1.000000e+00 : f32
    %67 = vector.broadcast %cst_26 : f32 to vector<1x384xf32>
    %68 = arith.addf %67, %66 : vector<1x384xf32>
    %69 = arith.divf %67, %68 : vector<1x384xf32>
    %70 = vector.extract_strided_slice %69 {offsets = [0, 0], sizes = [1, 128], strides = [1, 1]} : vector<1x384xf32> to vector<1x128xf32>
    %71 = vector.extract_strided_slice %69 {offsets = [0, 128], sizes = [1, 128], strides = [1, 1]} : vector<1x384xf32> to vector<1x128xf32>
    %72 = vector.extract_strided_slice %69 {offsets = [0, 256], sizes = [1, 128], strides = [1, 1]} : vector<1x384xf32> to vector<1x128xf32>
    %73 = vector.extract_strided_slice %63 {offsets = [0, 384], sizes = [1, 128], strides = [1, 1]} : vector<1x512xf32> to vector<1x128xf32>
    %74 = math.tanh %73 : vector<1x128xf32>
    %75 = arith.mulf %71, %55 : vector<1x128xf32>
    %76 = arith.mulf %70, %74 : vector<1x128xf32>
    %77 = arith.addf %75, %76 : vector<1x128xf32>
    %78 = math.tanh %77 : vector<1x128xf32>
    %79 = arith.mulf %72, %78 : vector<1x128xf32>
    %80 = arith.index_cast %c2_i32 : i32 to index
    %c0_27 = arith.constant 0 : index
    %81 = vector.load %arg6[%80, %c0_27] : memref<8x128xf32, #tpu.memory_space<vmem>>, vector<1x128xf32>
    tpu.vector_store %arg6[%80, %c0_27], %79 {strides = array<i32>} : memref<8x128xf32, #tpu.memory_space<vmem>>, vector<1x128xf32>,
    %c3_i32 = arith.constant 3 : i32
    %82 = arith.index_cast %c3_i32 : i32 to index
    %c0_28 = arith.constant 0 : index
    %83 = vector.load %arg7[%82, %c0_28] : memref<8x512xf32, #tpu.memory_space<vmem>>, vector<1x512xf32>
    %cst_29 = arith.constant dense<0.000000e+00> : vector<1x512xf32>
    %84 = tpu.matmul %79, %13, %cst_29 {dimension_numbers = #tpu.dot_dimension_numbers<[1], [0], [0], [1], [0, 0, 1, 1], [], []>} : vector<1x128xf32>, vector<128x512xf32>, vector<1x512xf32> -> vector<1x512xf32>
    %85 = arith.addf %83, %84 : vector<1x512xf32>
    %86 = vector.extract_strided_slice %85 {offsets = [0, 0], sizes = [1, 384], strides = [1, 1]} : vector<1x512xf32> to vector<1x384xf32>
    %87 = arith.negf %86 : vector<1x384xf32>
    %88 = math.exp %87 : vector<1x384xf32>
    %cst_30 = arith.constant 1.000000e+00 : f32
    %89 = vector.broadcast %cst_30 : f32 to vector<1x384xf32>
    %90 = arith.addf %89, %88 : vector<1x384xf32>
    %91 = arith.divf %89, %90 : vector<1x384xf32>
    %92 = vector.extract_strided_slice %91 {offsets = [0, 0], sizes = [1, 128], strides = [1, 1]} : vector<1x384xf32> to vector<1x128xf32>
    %93 = vector.extract_strided_slice %91 {offsets = [0, 128], sizes = [1, 128], strides = [1, 1]} : vector<1x384xf32> to vector<1x128xf32>
    %94 = vector.extract_strided_slice %91 {offsets = [0, 256], sizes = [1, 128], strides = [1, 1]} : vector<1x384xf32> to vector<1x128xf32>
    %95 = vector.extract_strided_slice %85 {offsets = [0, 384], sizes = [1, 128], strides = [1, 1]} : vector<1x512xf32> to vector<1x128xf32>
    %96 = math.tanh %95 : vector<1x128xf32>
    %97 = arith.mulf %93, %77 : vector<1x128xf32>
    %98 = arith.mulf %92, %96 : vector<1x128xf32>
    %99 = arith.addf %97, %98 : vector<1x128xf32>
    %100 = math.tanh %99 : vector<1x128xf32>
    %101 = arith.mulf %94, %100 : vector<1x128xf32>
    %102 = arith.index_cast %c3_i32 : i32 to index
    %c0_31 = arith.constant 0 : index
    %103 = vector.load %arg6[%102, %c0_31] : memref<8x128xf32, #tpu.memory_space<vmem>>, vector<1x128xf32>
    tpu.vector_store %arg6[%102, %c0_31], %101 {strides = array<i32>} : memref<8x128xf32, #tpu.memory_space<vmem>>, vector<1x128xf32>,
    %c4_i32 = arith.constant 4 : i32
    %104 = arith.index_cast %c4_i32 : i32 to index
    %c0_32 = arith.constant 0 : index
    %105 = vector.load %arg7[%104, %c0_32] : memref<8x512xf32, #tpu.memory_space<vmem>>, vector<1x512xf32>
    %cst_33 = arith.constant dense<0.000000e+00> : vector<1x512xf32>
    %106 = tpu.matmul %101, %13, %cst_33 {dimension_numbers = #tpu.dot_dimension_numbers<[1], [0], [0], [1], [0, 0, 1, 1], [], []>} : vector<1x128xf32>, vector<128x512xf32>, vector<1x512xf32> -> vector<1x512xf32>
    %107 = arith.addf %105, %106 : vector<1x512xf32>
    %108 = vector.extract_strided_slice %107 {offsets = [0, 0], sizes = [1, 384], strides = [1, 1]} : vector<1x512xf32> to vector<1x384xf32>
    %109 = arith.negf %108 : vector<1x384xf32>
    %110 = math.exp %109 : vector<1x384xf32>
    %cst_34 = arith.constant 1.000000e+00 : f32
    %111 = vector.broadcast %cst_34 : f32 to vector<1x384xf32>
    %112 = arith.addf %111, %110 : vector<1x384xf32>
    %113 = arith.divf %111, %112 : vector<1x384xf32>
    %114 = vector.extract_strided_slice %113 {offsets = [0, 0], sizes = [1, 128], strides = [1, 1]} : vector<1x384xf32> to vector<1x128xf32>
    %115 = vector.extract_strided_slice %113 {offsets = [0, 128], sizes = [1, 128], strides = [1, 1]} : vector<1x384xf32> to vector<1x128xf32>
    %116 = vector.extract_strided_slice %113 {offsets = [0, 256], sizes = [1, 128], strides = [1, 1]} : vector<1x384xf32> to vector<1x128xf32>
    %117 = vector.extract_strided_slice %107 {offsets = [0, 384], sizes = [1, 128], strides = [1, 1]} : vector<1x512xf32> to vector<1x128xf32>
    %118 = math.tanh %117 : vector<1x128xf32>
    %119 = arith.mulf %115, %99 : vector<1x128xf32>
    %120 = arith.mulf %114, %118 : vector<1x128xf32>
    %121 = arith.addf %119, %120 : vector<1x128xf32>
    %122 = math.tanh %121 : vector<1x128xf32>
    %123 = arith.mulf %116, %122 : vector<1x128xf32>
    %124 = arith.index_cast %c4_i32 : i32 to index
    %c0_35 = arith.constant 0 : index
    %125 = vector.load %arg6[%124, %c0_35] : memref<8x128xf32, #tpu.memory_space<vmem>>, vector<1x128xf32>
    tpu.vector_store %arg6[%124, %c0_35], %123 {strides = array<i32>} : memref<8x128xf32, #tpu.memory_space<vmem>>, vector<1x128xf32>,
    %c5_i32 = arith.constant 5 : i32
    %126 = arith.index_cast %c5_i32 : i32 to index
    %c0_36 = arith.constant 0 : index
    %127 = vector.load %arg7[%126, %c0_36] : memref<8x512xf32, #tpu.memory_space<vmem>>, vector<1x512xf32>
    %cst_37 = arith.constant dense<0.000000e+00> : vector<1x512xf32>
    %128 = tpu.matmul %123, %13, %cst_37 {dimension_numbers = #tpu.dot_dimension_numbers<[1], [0], [0], [1], [0, 0, 1, 1], [], []>} : vector<1x128xf32>, vector<128x512xf32>, vector<1x512xf32> -> vector<1x512xf32>
    %129 = arith.addf %127, %128 : vector<1x512xf32>
    %130 = vector.extract_strided_slice %129 {offsets = [0, 0], sizes = [1, 384], strides = [1, 1]} : vector<1x512xf32> to vector<1x384xf32>
    %131 = arith.negf %130 : vector<1x384xf32>
    %132 = math.exp %131 : vector<1x384xf32>
    %cst_38 = arith.constant 1.000000e+00 : f32
    %133 = vector.broadcast %cst_38 : f32 to vector<1x384xf32>
    %134 = arith.addf %133, %132 : vector<1x384xf32>
    %135 = arith.divf %133, %134 : vector<1x384xf32>
    %136 = vector.extract_strided_slice %135 {offsets = [0, 0], sizes = [1, 128], strides = [1, 1]} : vector<1x384xf32> to vector<1x128xf32>
    %137 = vector.extract_strided_slice %135 {offsets = [0, 128], sizes = [1, 128], strides = [1, 1]} : vector<1x384xf32> to vector<1x128xf32>
    %138 = vector.extract_strided_slice %135 {offsets = [0, 256], sizes = [1, 128], strides = [1, 1]} : vector<1x384xf32> to vector<1x128xf32>
    %139 = vector.extract_strided_slice %129 {offsets = [0, 384], sizes = [1, 128], strides = [1, 1]} : vector<1x512xf32> to vector<1x128xf32>
    %140 = math.tanh %139 : vector<1x128xf32>
    %141 = arith.mulf %137, %121 : vector<1x128xf32>
    %142 = arith.mulf %136, %140 : vector<1x128xf32>
    %143 = arith.addf %141, %142 : vector<1x128xf32>
    %144 = math.tanh %143 : vector<1x128xf32>
    %145 = arith.mulf %138, %144 : vector<1x128xf32>
    %146 = arith.index_cast %c5_i32 : i32 to index
    %c0_39 = arith.constant 0 : index
    %147 = vector.load %arg6[%146, %c0_39] : memref<8x128xf32, #tpu.memory_space<vmem>>, vector<1x128xf32>
    tpu.vector_store %arg6[%146, %c0_39], %145 {strides = array<i32>} : memref<8x128xf32, #tpu.memory_space<vmem>>, vector<1x128xf32>,
    %c6_i32 = arith.constant 6 : i32
    %148 = arith.index_cast %c6_i32 : i32 to index
    %c0_40 = arith.constant 0 : index
    %149 = vector.load %arg7[%148, %c0_40] : memref<8x512xf32, #tpu.memory_space<vmem>>, vector<1x512xf32>
    %cst_41 = arith.constant dense<0.000000e+00> : vector<1x512xf32>
    %150 = tpu.matmul %145, %13, %cst_41 {dimension_numbers = #tpu.dot_dimension_numbers<[1], [0], [0], [1], [0, 0, 1, 1], [], []>} : vector<1x128xf32>, vector<128x512xf32>, vector<1x512xf32> -> vector<1x512xf32>
    %151 = arith.addf %149, %150 : vector<1x512xf32>
    %152 = vector.extract_strided_slice %151 {offsets = [0, 0], sizes = [1, 384], strides = [1, 1]} : vector<1x512xf32> to vector<1x384xf32>
    %153 = arith.negf %152 : vector<1x384xf32>
    %154 = math.exp %153 : vector<1x384xf32>
    %cst_42 = arith.constant 1.000000e+00 : f32
    %155 = vector.broadcast %cst_42 : f32 to vector<1x384xf32>
    %156 = arith.addf %155, %154 : vector<1x384xf32>
    %157 = arith.divf %155, %156 : vector<1x384xf32>
    %158 = vector.extract_strided_slice %157 {offsets = [0, 0], sizes = [1, 128], strides = [1, 1]} : vector<1x384xf32> to vector<1x128xf32>
    %159 = vector.extract_strided_slice %157 {offsets = [0, 128], sizes = [1, 128], strides = [1, 1]} : vector<1x384xf32> to vector<1x128xf32>
    %160 = vector.extract_strided_slice %157 {offsets = [0, 256], sizes = [1, 128], strides = [1, 1]} : vector<1x384xf32> to vector<1x128xf32>
    %161 = vector.extract_strided_slice %151 {offsets = [0, 384], sizes = [1, 128], strides = [1, 1]} : vector<1x512xf32> to vector<1x128xf32>
    %162 = math.tanh %161 : vector<1x128xf32>
    %163 = arith.mulf %159, %143 : vector<1x128xf32>
    %164 = arith.mulf %158, %162 : vector<1x128xf32>
    %165 = arith.addf %163, %164 : vector<1x128xf32>
    %166 = math.tanh %165 : vector<1x128xf32>
    %167 = arith.mulf %160, %166 : vector<1x128xf32>
    %168 = arith.index_cast %c6_i32 : i32 to index
    %c0_43 = arith.constant 0 : index
    %169 = vector.load %arg6[%168, %c0_43] : memref<8x128xf32, #tpu.memory_space<vmem>>, vector<1x128xf32>
    tpu.vector_store %arg6[%168, %c0_43], %167 {strides = array<i32>} : memref<8x128xf32, #tpu.memory_space<vmem>>, vector<1x128xf32>,
    %c7_i32 = arith.constant 7 : i32
    %170 = arith.index_cast %c7_i32 : i32 to index
    %c0_44 = arith.constant 0 : index
    %171 = vector.load %arg7[%170, %c0_44] : memref<8x512xf32, #tpu.memory_space<vmem>>, vector<1x512xf32>
    %cst_45 = arith.constant dense<0.000000e+00> : vector<1x512xf32>
    %172 = tpu.matmul %167, %13, %cst_45 {dimension_numbers = #tpu.dot_dimension_numbers<[1], [0], [0], [1], [0, 0, 1, 1], [], []>} : vector<1x128xf32>, vector<128x512xf32>, vector<1x512xf32> -> vector<1x512xf32>
    %173 = arith.addf %171, %172 : vector<1x512xf32>
    %174 = vector.extract_strided_slice %173 {offsets = [0, 0], sizes = [1, 384], strides = [1, 1]} : vector<1x512xf32> to vector<1x384xf32>
    %175 = arith.negf %174 : vector<1x384xf32>
    %176 = math.exp %175 : vector<1x384xf32>
    %cst_46 = arith.constant 1.000000e+00 : f32
    %177 = vector.broadcast %cst_46 : f32 to vector<1x384xf32>
    %178 = arith.addf %177, %176 : vector<1x384xf32>
    %179 = arith.divf %177, %178 : vector<1x384xf32>
    %180 = vector.extract_strided_slice %179 {offsets = [0, 0], sizes = [1, 128], strides = [1, 1]} : vector<1x384xf32> to vector<1x128xf32>
    %181 = vector.extract_strided_slice %179 {offsets = [0, 128], sizes = [1, 128], strides = [1, 1]} : vector<1x384xf32> to vector<1x128xf32>
    %182 = vector.extract_strided_slice %179 {offsets = [0, 256], sizes = [1, 128], strides = [1, 1]} : vector<1x384xf32> to vector<1x128xf32>
    %183 = vector.extract_strided_slice %173 {offsets = [0, 384], sizes = [1, 128], strides = [1, 1]} : vector<1x512xf32> to vector<1x128xf32>
    %184 = math.tanh %183 : vector<1x128xf32>
    %185 = arith.mulf %181, %165 : vector<1x128xf32>
    %186 = arith.mulf %180, %184 : vector<1x128xf32>
    %187 = arith.addf %185, %186 : vector<1x128xf32>
    %188 = math.tanh %187 : vector<1x128xf32>
    %189 = arith.mulf %182, %188 : vector<1x128xf32>
    %190 = arith.index_cast %c7_i32 : i32 to index
    %c0_47 = arith.constant 0 : index
    %191 = vector.load %arg6[%190, %c0_47] : memref<8x128xf32, #tpu.memory_space<vmem>>, vector<1x128xf32>
    tpu.vector_store %arg6[%190, %c0_47], %189 {strides = array<i32>} : memref<8x128xf32, #tpu.memory_space<vmem>>, vector<1x128xf32>,
    %c8_i32 = arith.constant 8 : i32
    %c1_i32_48 = arith.constant 1 : i32
    %192 = arith.cmpi eq, %arg0, %c1_i32_48 : i32
    %193 = arith.extui %192 : i1 to i32
    %c0_i32_49 = arith.constant 0 : i32
    %194 = arith.cmpi ne, %193, %c0_i32_49 : i32
    scf.if %194 {
      %c0_50 = arith.constant 0 : index
      %c0_51 = arith.constant 0 : index
      %195 = vector.load %arg6[%c0_50, %c0_51] : memref<8x128xf32, #tpu.memory_space<vmem>>, vector<8x128xf32>
      %c0_52 = arith.constant 0 : index
      %c0_53 = arith.constant 0 : index
      %196 = vector.load %arg5[%c0_52, %c0_53] : memref<8x128xf32, #tpu.memory_space<vmem>>, vector<8x128xf32>
      tpu.vector_store %arg5[%c0_52, %c0_53], %195 {strides = array<i32>} : memref<8x128xf32, #tpu.memory_space<vmem>>, vector<8x128xf32>,
    } else {
    }
    return
  }
  func.func @transform_0(%arg0: i32) -> (i32, i32) {
    %c0_i32 = arith.constant 0 : i32
    %c0_i32_0 = arith.constant 0 : i32
    %c0_i32_1 = arith.constant 0 : i32
    return %c0_i32, %c0_i32_0 : i32, i32
  }
  func.func @transform_1(%arg0: i32) -> (i32, i32, i32) {
    %c0_i32 = arith.constant 0 : i32
    %c0_i32_0 = arith.constant 0 : i32
    %c0_i32_1 = arith.constant 0 : i32
    return %arg0, %c0_i32, %c0_i32_0 : i32, i32, i32
  }
  func.func @transform_2(%arg0: i32) -> (i32, i32, i32) {
    %c0_i32 = arith.constant 0 : i32
    %c0_i32_0 = arith.constant 0 : i32
    %c0_i32_1 = arith.constant 0 : i32
    return %arg0, %c0_i32, %c0_i32_0 : i32, i32, i32
  }
  func.func @transform_3(%arg0: i32) -> (i32, i32, i32) {
    %c0_i32 = arith.constant 0 : i32
    %c0_i32_0 = arith.constant 0 : i32
    %c0_i32_1 = arith.constant 0 : i32
    return %arg0, %c0_i32, %c0_i32_0 : i32, i32, i32
  }
  func.func @transform_4(%arg0: i32) -> (i32, i32) {
    %c0_i32 = arith.constant 0 : i32
    %c0_i32_0 = arith.constant 0 : i32
    %c0_i32_1 = arith.constant 0 : i32
    return %c0_i32, %c0_i32_0 : i32, i32
  }
}

</mosaic_0001>

<llo_original>
// kernel: tpu_custom_call.1
$region0: #{tpu_custom_call.1}
  #allocation0 [shape = 'u32[]', space=smem, size = 0x4, offset = 0x4, fixed_abs, tag = 'smem constant byte address 0x4 - core index']
  #allocation1 [shape = 'u32[72,128]{1,0:T(1,128)}', space=vmem, size = 0x9000, scoped, tag = 'internal scratch']
  #allocation2 [shape = 'f32[8,128]{1,0:T(8,128)}', space=vmem, size = 0x1000, scoped, tag = 'scratch operand']
  #allocation3 [shape = 'f32[8,512]{1,0:T(8,128)}', space=vmem, size = 0x4000, scoped, tag = 'scratch operand']
  %s0 = inlined_call_operand.hbm [shape: f32[8,128], index: 0, kind: input, shape index: {}]
  %s1 = inlined_call_operand.hbm [shape: f32[2,128,512], index: 1, kind: input, shape index: {}]
  %s2 = inlined_call_operand.hbm [shape: f32[2,128,512], index: 2, kind: input, shape index: {}]
  %s3 = inlined_call_operand.hbm [shape: f32[2,1,512], index: 3, kind: input, shape index: {}]
  %s4 = inlined_call_operand.hbm [shape: f32[8,128], index: 4, kind: output, shape index: {}]
  %s5 = sld [smem:[#allocation0]]
  $region73: #{tpu_custom_call.1} parent=0
    _
  %s7 = ssub.s32 1, %s5
  %s8 = scalar_select 0, %s7, %s5
  $region1: #{tpu_custom_call.1} parent=0
    #allocation4 [shape = 'u8[4096]{0}', space=vmem, size = 0x1000, scoped, tag = 'input window, operand 0, single buffered']
    #allocation5 [shape = 's32[2]{0}', space=sflag, size = 0x8, scoped, tag = 'scoped memory for tpu_custom_call.1']
    #allocation6 [shape = 's32[2]{0}', space=sflag, size = 0x8, scoped, tag = 'scoped memory for tpu_custom_call.1']
    #allocation7 [shape = 'u8[524288]{0}', space=vmem, size = 0x80000, scoped, tag = 'input window, operand 1']
    #allocation8 [shape = 's32[2]{0}', space=sflag, size = 0x8, scoped, tag = 'scoped memory for tpu_custom_call.1']
    #allocation9 [shape = 'u8[524288]{0}', space=vmem, size = 0x80000, scoped, tag = 'input window, operand 2']
    #allocation10 [shape = 'u8[4096]{0}', space=vmem, size = 0x1000, scoped, tag = 'input window, operand 3']
    #allocation11 [shape = 's32[2]{0}', space=sflag, size = 0x8, scoped, tag = 'scoped memory for tpu_custom_call.1']
    #allocation12 [shape = 'u8[4096]{0}', space=vmem, size = 0x1000, scoped, tag = 'output window, operand 0, single buffered']
    %9 = vsyncpa [#allocation5], 0
    %10 = vsyncpa [#allocation8], 0
    %s11 = scalar_lea.sflag [#allocation8], 1
    %12 = vsyncpa %s11, 0
    %13 = vsyncpa [#allocation11], 0
    %s14 = scalar_lea.sflag [#allocation11], 1
    %15 = vsyncpa %s14, 0
    %16 = vsyncpa [#allocation6], 0
    loop: start=0, step=1, limit=4
    $region2: #{tpu_custom_call.1} parent=1 // loop_pre_header
      _
    $region3: #{tpu_custom_call.1} parent=1 // loop_header
      %s18 = sphi 0, %s22
      %p19 = scmp.ge.s32.totalorder %s18, 4
      %s26 = sphi 0, %s26
      %s28 = sphi 0, %s26
      %s29 = sphi 0, %s28
      %s43 = sphi 0, %s29
      %s49 = sphi 0, %s51
      %s52 = sphi 0, %s49
      %s53 = sphi 0, %s52
      %s69 = sphi 0, %s53
      %s75 = sphi 0, %s77
      %s78 = sphi 0, %s75
      %s79 = sphi 0, %s78
      %s95 = sphi 0, %s79
      %s101 = sphi 0, %s103
      %s104 = sphi 0, %s101
      %s105 = sphi 0, %s104
      %s121 = sphi 0, %s105
      %s125 = sphi 0, %s125
      %s127 = sphi 0, %s125
      %s128 = sphi 0, %s127
      %s142 = sphi 0, %s128
    $region4: #{tpu_custom_call.1} parent=1 // loop_header_branch
      %21 = sbr.rel (%p19) target = $region8
    $region5: #{tpu_custom_call.1} parent=1 // loop_body
      %s23 = ssub.s32 %s18, 1
      %s24 = ssub.s32 %s18, 2
      %s25 = sadd.s32 %s18, 1
      %s27 = sadd.s32 %s26, 1
      %p30 = scmp.eq.s32.totalorder %s18, 1
      %p31 = scmp.ne.s32.totalorder %s26, %s28
      %p32 = scmp.eq.s32.totalorder %s18, 0
      %p33 = por %p31, %p32
      %p34 = scmp.ne.s32.totalorder %s26, %s28
      %p35 = scmp.eq.s32.totalorder %s23, 1
      %p36 = por %p34, %p35
      %p37 = scmp.ne.s32.totalorder %s28, %s29
      %p38 = scmp.eq.s32.totalorder %s23, 0
      %p39 = por %p37, %p38
      %p40 = scmp.ne.s32.totalorder %s28, %s29
      %p41 = scmp.eq.s32.totalorder %s24, 1
      %p42 = por %p40, %p41
      %p44 = scmp.ne.s32.totalorder %s29, %s43
      %p45 = scmp.eq.s32.totalorder %s24, 0
      %p46 = por %p44, %p45
      %s47 = ssub.s32 %s18, %s25
      %p48 = scmp.eq.s32.totalorder %s47, 0
      %s50 = sadd.s32 %s49, 1
      %s51 = scalar_select %p48, %s49, %s50
      %p54 = pneg %p48
      %p55 = scmp.eq.s32.totalorder %s18, 1
      %p56 = por %p54, %p55
      %p57 = scmp.ne.s32.totalorder %s49, %s52
      %p58 = scmp.eq.s32.totalorder %s18, 0
      %p59 = por %p57, %p58
      %p60 = scmp.ne.s32.totalorder %s49, %s52
      %p61 = scmp.eq.s32.totalorder %s23, 1
      %p62 = por %p60, %p61
      %p63 = scmp.ne.s32.totalorder %s52, %s53
      %p64 = scmp.eq.s32.totalorder %s23, 0
      %p65 = por %p63, %p64
      %p66 = scmp.ne.s32.totalorder %s52, %s53
      %p67 = scmp.eq.s32.totalorder %s24, 1
      %p68 = por %p66, %p67
      %p70 = scmp.ne.s32.totalorder %s53, %s69
      %p71 = scmp.eq.s32.totalorder %s24, 0
      %p72 = por %p70, %p71
      %s73 = ssub.s32 %s18, %s25
      %p74 = scmp.eq.s32.totalorder %s73, 0
      %s76 = sadd.s32 %s75, 1
      %s77 = scalar_select %p74, %s75, %s76
      %p80 = pneg %p74
      %p81 = scmp.eq.s32.totalorder %s18, 1
      %p82 = por %p80, %p81
      %p83 = scmp.ne.s32.totalorder %s75, %s78
      %p84 = scmp.eq.s32.totalorder %s18, 0
      %p85 = por %p83, %p84
      %p86 = scmp.ne.s32.totalorder %s75, %s78
      %p87 = scmp.eq.s32.totalorder %s23, 1
      %p88 = por %p86, %p87
      %p89 = scmp.ne.s32.totalorder %s78, %s79
      %p90 = scmp.eq.s32.totalorder %s23, 0
      %p91 = por %p89, %p90
      %p92 = scmp.ne.s32.totalorder %s78, %s79
      %p93 = scmp.eq.s32.totalorder %s24, 1
      %p94 = por %p92, %p93
      %p96 = scmp.ne.s32.totalorder %s79, %s95
      %p97 = scmp.eq.s32.totalorder %s24, 0
      %p98 = por %p96, %p97
      %s99 = ssub.s32 %s18, %s25
      %p100 = scmp.eq.s32.totalorder %s99, 0
      %s102 = sadd.s32 %s101, 1
      %s103 = scalar_select %p100, %s101, %s102
      %p106 = pneg %p100
      %p107 = scmp.eq.s32.totalorder %s18, 1
      %p108 = por %p106, %p107
      %p109 = scmp.ne.s32.totalorder %s101, %s104
      %p110 = scmp.eq.s32.totalorder %s18, 0
      %p111 = por %p109, %p110
      %p112 = scmp.ne.s32.totalorder %s101, %s104
      %p113 = scmp.eq.s32.totalorder %s23, 1
      %p114 = por %p112, %p113
      %p115 = scmp.ne.s32.totalorder %s104, %s105
      %p116 = scmp.eq.s32.totalorder %s23, 0
      %p117 = por %p115, %p116
      %p118 = scmp.ne.s32.totalorder %s104, %s105
      %p119 = scmp.eq.s32.totalorder %s24, 1
      %p120 = por %p118, %p119
      %p122 = scmp.ne.s32.totalorder %s105, %s121
      %p123 = scmp.eq.s32.totalorder %s24, 0
      %p124 = por %p122, %p123
      %s126 = sadd.s32 %s125, 1
      %p129 = scmp.eq.s32.totalorder %s18, 1
      %p130 = scmp.ne.s32.totalorder %s125, %s127
      %p131 = scmp.eq.s32.totalorder %s18, 0
      %p132 = por %p130, %p131
      %p133 = scmp.ne.s32.totalorder %s125, %s127
      %p134 = scmp.eq.s32.totalorder %s23, 1
      %p135 = por %p133, %p134
      %p136 = scmp.ne.s32.totalorder %s127, %s128
      %p137 = scmp.eq.s32.totalorder %s23, 0
      %p138 = por %p136, %p137
      %p139 = scmp.ne.s32.totalorder %s127, %s128
      %p140 = scmp.eq.s32.totalorder %s24, 1
      %p141 = por %p139, %p140
      %p143 = scmp.ne.s32.totalorder %s128, %s142
      %p144 = scmp.eq.s32.totalorder %s24, 0
      %p145 = por %p143, %p144
      %p146 = scmp.le.s32.totalorder 1, %s18
      %p147 = scmp.lt.s32.totalorder %s18, 3
      %p148 = pnand %p146, %p147
      %p149 = pneg %p148
      // Predicated region
      $region9: #{tpu_custom_call.1} parent=5 // pred_check
        _
      $region10: #{tpu_custom_call.1} parent=5 // pred_check_branch
        %151 = sbr.rel (%p148) target = $region12
      $region11: #{tpu_custom_call.1} parent=5 // pred_region
        %s152 = ssub.s32 %s18, 1
        // Predicated region
        $region13: #{tpu_custom_call.1} parent=11 // pred_check
          %p153 = pneg %p39
        $region14: #{tpu_custom_call.1} parent=11 // pred_check_branch
          %155 = sbr.rel (%p153) target = $region16
        $region15: #{tpu_custom_call.1} parent=11 // pred_region
          %157 = vsyncadd [#allocation5], 0
          %s159 = sshll.u32 %s0, 4
          %s160 = int_to_ptr.hbm [resolvable:$true] %s159
          %s161 = sshll.u32 [#allocation4], 4
          %s162 = int_to_ptr.vmem [resolvable:$true] %s161
          %164 = dma.hbm_to_vmem [thread:$0]  %s160, 128, %s162, [#allocation5]
        $region16: #{tpu_custom_call.1} parent=11 // pred_fallthru
          _
      $region12: #{tpu_custom_call.1} parent=5 // pred_fallthru
        _
      %p165 = scmp.lt.s32.totalorder %s18, 2
      // Predicated region
      $region17: #{tpu_custom_call.1} parent=5 // pred_check
        %p166 = pneg %p165
      $region18: #{tpu_custom_call.1} parent=5 // pred_check_branch
        %168 = sbr.rel (%p166) target = $region20
      $region19: #{tpu_custom_call.1} parent=5 // pred_region
        // Predicated region
        $region21: #{tpu_custom_call.1} parent=19 // pred_check
          %p169 = pneg %p59
        $region22: #{tpu_custom_call.1} parent=19 // pred_check_branch
          %171 = sbr.rel (%p169) target = $region24
        $region23: #{tpu_custom_call.1} parent=19 // pred_region
          %s172 = sand.u32 %s18, 1
          %s173 = scalar_lea.sflag [#allocation8], %s172
          %s174 = sand.u32 %s49, 1
          %s175 = smul.addr %s174, 512
          %s176 = scalar_lea.vmem [#allocation7], %s175
          %178 = vsyncadd %s173, 0
          %s179 = smul.addr %s18, 64
          %s180 = smul.addr %s179, 8
          %s181 = scalar_lea.hbm %s1, %s180
          %s182 = sshll.u32 %s181, 4
          %s183 = int_to_ptr.hbm [resolvable:$true] %s182
          %s184 = sshll.u32 %s176, 4
          %s185 = int_to_ptr.vmem [resolvable:$true] %s184
          %190 = dma.hbm_to_vmem [thread:$0]  %s183, 8192, %s185, %s173, 512, 512, 32
        $region24: #{tpu_custom_call.1} parent=19 // pred_fallthru
          _
        // Predicated region
        $region25: #{tpu_custom_call.1} parent=19 // pred_check
          %p191 = pneg %p85
        $region26: #{tpu_custom_call.1} parent=19 // pred_check_branch
          %193 = sbr.rel (%p191) target = $region28
        $region27: #{tpu_custom_call.1} parent=19 // pred_region
          %s194 = sand.u32 %s18, 1
          %s195 = scalar_lea.sflag [#allocation8], %s194
          %s196 = sand.u32 %s75, 1
          %s197 = smul.addr %s196, 512
          %s198 = scalar_lea.vmem [#allocation9], %s197
          %200 = vsyncadd %s195, 0
          %s201 = smul.addr %s18, 64
          %s202 = smul.addr %s201, 8
          %s203 = scalar_lea.hbm %s2, %s202
          %s204 = sshll.u32 %s203, 4
          %s205 = int_to_ptr.hbm [resolvable:$true] %s204
          %s206 = sshll.u32 %s198, 4
          %s207 = int_to_ptr.vmem [resolvable:$true] %s206
          %212 = dma.hbm_to_vmem [thread:$0]  %s205, 8192, %s207, %s195, 512, 512, 32
        $region28: #{tpu_custom_call.1} parent=19 // pred_fallthru
          _
        // Predicated region
        $region29: #{tpu_custom_call.1} parent=19 // pred_check
          %p213 = pneg %p111
        $region30: #{tpu_custom_call.1} parent=19 // pred_check_branch
          %215 = sbr.rel (%p213) target = $region32
        $region31: #{tpu_custom_call.1} parent=19 // pred_region
          %s216 = sand.u32 %s101, 1
          %s217 = scalar_lea.sflag [#allocation11], %s216
          %s218 = sand.u32 %s101, 1
          %s219 = smul.addr %s218, 4
          %s220 = scalar_lea.vmem [#allocation10], %s219
          %222 = vsyncadd %s217, 0
          %s223 = smul.addr %s18, 4
          %s224 = scalar_lea.hbm %s3, %s223
          %s226 = sshll.u32 %s224, 4
          %s227 = int_to_ptr.hbm [resolvable:$true] %s226
          %s228 = sshll.u32 %s220, 4
          %s229 = int_to_ptr.vmem [resolvable:$true] %s228
          %231 = dma.hbm_to_vmem [thread:$0]  %s227, 64, %s229, %s217
        $region32: #{tpu_custom_call.1} parent=19 // pred_fallthru
          _
      $region20: #{tpu_custom_call.1} parent=5 // pred_fallthru
        _
      %p232 = scmp.le.s32.totalorder 1, %s18
      %p233 = scmp.lt.s32.totalorder %s18, 3
      %p234 = pnand %p232, %p233
      %p235 = pneg %p234
      // Predicated region
      $region33: #{tpu_custom_call.1} parent=5 // pred_check
        _
      $region34: #{tpu_custom_call.1} parent=5 // pred_check_branch
        %237 = sbr.rel (%p234) target = $region36
      $region35: #{tpu_custom_call.1} parent=5 // pred_region
        %s238 = ssub.s32 %s18, 1
        // Predicated region
        $region37: #{tpu_custom_call.1} parent=35 // pred_check
          %p239 = pneg %p39
        $region38: #{tpu_custom_call.1} parent=35 // pred_check_branch
          %241 = sbr.rel (%p239) target = $region40
        $region39: #{tpu_custom_call.1} parent=35 // pred_region
          %243 = dma.done [#allocation5], 128
        $region40: #{tpu_custom_call.1} parent=35 // pred_fallthru
          _
        %s244 = sand.u32 %s23, 1
        %s245 = scalar_lea.sflag [#allocation8], %s244
        %s246 = sand.u32 %s52, 1
        %s247 = smul.addr %s246, 512
        %s248 = scalar_lea.vmem [#allocation7], %s247
        // Predicated region
        $region41: #{tpu_custom_call.1} parent=35 // pred_check
          %p249 = pneg %p65
        $region42: #{tpu_custom_call.1} parent=35 // pred_check_branch
          %251 = sbr.rel (%p249) target = $region44
        $region43: #{tpu_custom_call.1} parent=35 // pred_region
          %253 = dma.done %s245, 8192
        $region44: #{tpu_custom_call.1} parent=35 // pred_fallthru
          _
        %s254 = sand.u32 %s23, 1
        %s255 = scalar_lea.sflag [#allocation8], %s254
        %s256 = sand.u32 %s78, 1
        %s257 = smul.addr %s256, 512
        %s258 = scalar_lea.vmem [#allocation9], %s257
        // Predicated region
        $region45: #{tpu_custom_call.1} parent=35 // pred_check
          %p259 = pneg %p91
        $region46: #{tpu_custom_call.1} parent=35 // pred_check_branch
          %261 = sbr.rel (%p259) target = $region48
        $region47: #{tpu_custom_call.1} parent=35 // pred_region
          %263 = dma.done %s255, 8192
        $region48: #{tpu_custom_call.1} parent=35 // pred_fallthru
          _
        %s264 = sand.u32 %s104, 1
        %s265 = scalar_lea.sflag [#allocation11], %s264
        %s266 = sand.u32 %s104, 1
        %s267 = smul.addr %s266, 4
        %s268 = scalar_lea.vmem [#allocation10], %s267
        // Predicated region
        $region49: #{tpu_custom_call.1} parent=35 // pred_check
          %p269 = pneg %p117
        $region50: #{tpu_custom_call.1} parent=35 // pred_check_branch
          %271 = sbr.rel (%p269) target = $region52
        $region51: #{tpu_custom_call.1} parent=35 // pred_region
          %273 = dma.done %s265, 64
        $region52: #{tpu_custom_call.1} parent=35 // pred_fallthru
          _
        %p274 = pneg %p39
        %p275 = pneg %p36
        %s276 = sand.u32 %s23, 1
        %s277 = scalar_lea.sflag [#allocation8], %s276
        %s278 = sand.u32 %s52, 1
        %s279 = smul.addr %s278, 512
        %s280 = scalar_lea.vmem [#allocation7], %s279
        %p281 = pneg %p65
        %p282 = pneg %p62
        %s283 = sand.u32 %s23, 1
        %s284 = scalar_lea.sflag [#allocation8], %s283
        %s285 = sand.u32 %s78, 1
        %s286 = smul.addr %s285, 512
        %s287 = scalar_lea.vmem [#allocation9], %s286
        %p288 = pneg %p91
        %p289 = pneg %p88
        %s290 = sand.u32 %s104, 1
        %s291 = scalar_lea.sflag [#allocation11], %s290
        %s292 = sand.u32 %s104, 1
        %s293 = smul.addr %s292, 4
        %s294 = scalar_lea.vmem [#allocation10], %s293
        %p295 = pneg %p117
        %p296 = pneg %p114
        %p297 = pneg %p138
        %p298 = pneg %p135
        %p299 = scmp.eq.s32.totalorder %s23, 0
        // Predicated region
        $region53: #{tpu_custom_call.1} parent=35 // pred_check
          %p300 = pneg %p299
        $region54: #{tpu_custom_call.1} parent=35 // pred_check_branch
          %302 = sbr.rel (%p300) target = $region56
        $region55: #{tpu_custom_call.1} parent=35 // pred_region
          %v303 = vld [vmem:[#allocation4] sm:$0xff]
          %304 = vst [vmem:[#allocation2] sm:$0xff] %v303
        $region56: #{tpu_custom_call.1} parent=35 // pred_fallthru
          _
        %v305 = vld [vmem:[#allocation2] sm:$0xff]
        %v306 = vld [vmem:[%s248] sm:$0xff]
        %v307 = vld [vmem:[%s248 + $0x8] sm:$0xff]
        %v308 = vld [vmem:[%s248 + $0x10] sm:$0xff]
        %v309 = vld [vmem:[%s248 + $0x18] sm:$0xff]
        %v310 = vld [vmem:[%s248 + $0x20] sm:$0xff]
        %v311 = vld [vmem:[%s248 + $0x28] sm:$0xff]
        %v312 = vld [vmem:[%s248 + $0x30] sm:$0xff]
        %v313 = vld [vmem:[%s248 + $0x38] sm:$0xff]
        %v314 = vld [vmem:[%s248 + $0x40] sm:$0xff]
        %v315 = vld [vmem:[%s248 + $0x48] sm:$0xff]
        %v316 = vld [vmem:[%s248 + $0x50] sm:$0xff]
        %v317 = vld [vmem:[%s248 + $0x58] sm:$0xff]
        %v318 = vld [vmem:[%s248 + $0x60] sm:$0xff]
        %v319 = vld [vmem:[%s248 + $0x68] sm:$0xff]
        %v320 = vld [vmem:[%s248 + $0x70] sm:$0xff]
        %v321 = vld [vmem:[%s248 + $0x78] sm:$0xff]
        %v322 = vld [vmem:[%s248 + $0x80] sm:$0xff]
        %v323 = vld [vmem:[%s248 + $0x88] sm:$0xff]
        %v324 = vld [vmem:[%s248 + $0x90] sm:$0xff]
        %v325 = vld [vmem:[%s248 + $0x98] sm:$0xff]
        %v326 = vld [vmem:[%s248 + $0xa0] sm:$0xff]
        %v327 = vld [vmem:[%s248 + $0xa8] sm:$0xff]
        %v328 = vld [vmem:[%s248 + $0xb0] sm:$0xff]
        %v329 = vld [vmem:[%s248 + $0xb8] sm:$0xff]
        %v330 = vld [vmem:[%s248 + $0xc0] sm:$0xff]
        %v331 = vld [vmem:[%s248 + $0xc8] sm:$0xff]
        %v332 = vld [vmem:[%s248 + $0xd0] sm:$0xff]
        %v333 = vld [vmem:[%s248 + $0xd8] sm:$0xff]
        %v334 = vld [vmem:[%s248 + $0xe0] sm:$0xff]
        %v335 = vld [vmem:[%s248 + $0xe8] sm:$0xff]
        %v336 = vld [vmem:[%s248 + $0xf0] sm:$0xff]
        %v337 = vld [vmem:[%s248 + $0xf8] sm:$0xff]
        %v338 = vld [vmem:[%s248 + $0x100] sm:$0xff]
        %v339 = vld [vmem:[%s248 + $0x108] sm:$0xff]
        %v340 = vld [vmem:[%s248 + $0x110] sm:$0xff]
        %v341 = vld [vmem:[%s248 + $0x118] sm:$0xff]
        %v342 = vld [vmem:[%s248 + $0x120] sm:$0xff]
        %v343 = vld [vmem:[%s248 + $0x128] sm:$0xff]
        %v344 = vld [vmem:[%s248 + $0x130] sm:$0xff]
        %v345 = vld [vmem:[%s248 + $0x138] sm:$0xff]
        %v346 = vld [vmem:[%s248 + $0x140] sm:$0xff]
        %v347 = vld [vmem:[%s248 + $0x148] sm:$0xff]
        %v348 = vld [vmem:[%s248 + $0x150] sm:$0xff]
        %v349 = vld [vmem:[%s248 + $0x158] sm:$0xff]
        %v350 = vld [vmem:[%s248 + $0x160] sm:$0xff]
        %v351 = vld [vmem:[%s248 + $0x168] sm:$0xff]
        %v352 = vld [vmem:[%s248 + $0x170] sm:$0xff]
        %v353 = vld [vmem:[%s248 + $0x178] sm:$0xff]
        %v354 = vld [vmem:[%s248 + $0x180] sm:$0xff]
        %v355 = vld [vmem:[%s248 + $0x188] sm:$0xff]
        %v356 = vld [vmem:[%s248 + $0x190] sm:$0xff]
        %v357 = vld [vmem:[%s248 + $0x198] sm:$0xff]
        %v358 = vld [vmem:[%s248 + $0x1a0] sm:$0xff]
        %v359 = vld [vmem:[%s248 + $0x1a8] sm:$0xff]
        %v360 = vld [vmem:[%s248 + $0x1b0] sm:$0xff]
        %v361 = vld [vmem:[%s248 + $0x1b8] sm:$0xff]
        %v362 = vld [vmem:[%s248 + $0x1c0] sm:$0xff]
        %v363 = vld [vmem:[%s248 + $0x1c8] sm:$0xff]
        %v364 = vld [vmem:[%s248 + $0x1d0] sm:$0xff]
        %v365 = vld [vmem:[%s248 + $0x1d8] sm:$0xff]
        %v366 = vld [vmem:[%s248 + $0x1e0] sm:$0xff]
        %v367 = vld [vmem:[%s248 + $0x1e8] sm:$0xff]
        %v368 = vld [vmem:[%s248 + $0x1f0] sm:$0xff]
        %v369 = vld [vmem:[%s248 + $0x1f8] sm:$0xff]
        %v370 = vld [vmem:[%s268] sm:$0xf]
        %v372 = vperm.slane %v370, 0
        %v373 = vperm.slane %v370, 1
        %v374 = vperm.slane %v370, 2
        %v375 = vperm.slane %v370, 3
        %380 = vmatpush.msra.mxu0 %v366
        %381 = vmatpush.msra.mxu0 %v362
        %382 = vmatpush.msra.mxu0 %v358
        %383 = vmatpush.msra.mxu0 %v354
        %384 = vmatpush.msra.mxu0 %v350
        %385 = vmatpush.msra.mxu0 %v346
        %386 = vmatpush.msra.mxu0 %v342
        %387 = vmatpush.msra.mxu0 %v338
        %388 = vmatpush.msra.mxu0 %v334
        %389 = vmatpush.msra.mxu0 %v330
        %390 = vmatpush.msra.mxu0 %v326
        %391 = vmatpush.msra.mxu0 %v322
        %392 = vmatpush.msra.mxu0 %v318
        %393 = vmatpush.msra.mxu0 %v314
        %394 = vmatpush.msra.mxu0 %v310
        %395 = vmatpush.msra.mxu0 %v306
        %396 = vmatmul.f32.gmra.mxu0 %v305
        %v397 = vpop.f32.mrf.mxu0
        %v398 = vadd.f32 %v372, %v397
        %399 = vdwg.mxu0
        %400 = vmatpush.msra.mxu0 %v367
        %401 = vmatpush.msra.mxu0 %v363
        %402 = vmatpush.msra.mxu0 %v359
        %403 = vmatpush.msra.mxu0 %v355
        %404 = vmatpush.msra.mxu0 %v351
        %405 = vmatpush.msra.mxu0 %v347
        %406 = vmatpush.msra.mxu0 %v343
        %407 = vmatpush.msra.mxu0 %v339
        %408 = vmatpush.msra.mxu0 %v335
        %409 = vmatpush.msra.mxu0 %v331
        %410 = vmatpush.msra.mxu0 %v327
        %411 = vmatpush.msra.mxu0 %v323
        %412 = vmatpush.msra.mxu0 %v319
        %413 = vmatpush.msra.mxu0 %v315
        %414 = vmatpush.msra.mxu0 %v311
        %415 = vmatpush.msra.mxu0 %v307
        %416 = vmatmul.f32.gmra.mxu0 %v305
        %v417 = vpop.f32.mrf.mxu0
        %v418 = vadd.f32 %v373, %v417
        %419 = vdwg.mxu0
        %420 = vmatpush.msra.mxu0 %v368
        %421 = vmatpush.msra.mxu0 %v364
        %422 = vmatpush.msra.mxu0 %v360
        %423 = vmatpush.msra.mxu0 %v356
        %424 = vmatpush.msra.mxu0 %v352
        %425 = vmatpush.msra.mxu0 %v348
        %426 = vmatpush.msra.mxu0 %v344
        %427 = vmatpush.msra.mxu0 %v340
        %428 = vmatpush.msra.mxu0 %v336
        %429 = vmatpush.msra.mxu0 %v332
        %430 = vmatpush.msra.mxu0 %v328
        %431 = vmatpush.msra.mxu0 %v324
        %432 = vmatpush.msra.mxu0 %v320
        %433 = vmatpush.msra.mxu0 %v316
        %434 = vmatpush.msra.mxu0 %v312
        %435 = vmatpush.msra.mxu0 %v308
        %436 = vmatmul.f32.gmra.mxu0 %v305
        %v437 = vpop.f32.mrf.mxu0
        %v438 = vadd.f32 %v374, %v437
        %439 = vdwg.mxu0
        %440 = vmatpush.msra.mxu0 %v369
        %441 = vmatpush.msra.mxu0 %v365
        %442 = vmatpush.msra.mxu0 %v361
        %443 = vmatpush.msra.mxu0 %v357
        %444 = vmatpush.msra.mxu0 %v353
        %445 = vmatpush.msra.mxu0 %v349
        %446 = vmatpush.msra.mxu0 %v345
        %447 = vmatpush.msra.mxu0 %v341
        %448 = vmatpush.msra.mxu0 %v337
        %449 = vmatpush.msra.mxu0 %v333
        %450 = vmatpush.msra.mxu0 %v329
        %451 = vmatpush.msra.mxu0 %v325
        %452 = vmatpush.msra.mxu0 %v321
        %453 = vmatpush.msra.mxu0 %v317
        %454 = vmatpush.msra.mxu0 %v313
        %455 = vmatpush.msra.mxu0 %v309
        %456 = vmatmul.f32.gmra.mxu0 %v305
        %v457 = vpop.f32.mrf.mxu0
        %v458 = vadd.f32 %v375, %v457
        %459 = vdwg.mxu0
        %460 = vst [vmem:[#allocation3] sm:$0xff] %v398
        %461 = vst [vmem:[#allocation3 + $0x8] sm:$0xff] %v418
        %462 = vst [vmem:[#allocation3 + $0x10] sm:$0xff] %v438
        %463 = vst [vmem:[#allocation3 + $0x18] sm:$0xff] %v458
        %v464 = vld [vmem:[%s258] sm:$0xff]
        %v465 = vld [vmem:[%s258 + $0x8] sm:$0xff]
        %v466 = vld [vmem:[%s258 + $0x10] sm:$0xff]
        %v467 = vld [vmem:[%s258 + $0x18] sm:$0xff]
        %v468 = vld [vmem:[%s258 + $0x20] sm:$0xff]
        %v469 = vld [vmem:[%s258 + $0x28] sm:$0xff]
        %v470 = vld [vmem:[%s258 + $0x30] sm:$0xff]
        %v471 = vld [vmem:[%s258 + $0x38] sm:$0xff]
        %v472 = vld [vmem:[%s258 + $0x40] sm:$0xff]
        %v473 = vld [vmem:[%s258 + $0x48] sm:$0xff]
        %v474 = vld [vmem:[%s258 + $0x50] sm:$0xff]
        %v475 = vld [vmem:[%s258 + $0x58] sm:$0xff]
        %v476 = vld [vmem:[%s258 + $0x60] sm:$0xff]
        %v477 = vld [vmem:[%s258 + $0x68] sm:$0xff]
        %v478 = vld [vmem:[%s258 + $0x70] sm:$0xff]
        %v479 = vld [vmem:[%s258 + $0x78] sm:$0xff]
        %v480 = vld [vmem:[%s258 + $0x80] sm:$0xff]
        %v481 = vld [vmem:[%s258 + $0x88] sm:$0xff]
        %v482 = vld [vmem:[%s258 + $0x90] sm:$0xff]
        %v483 = vld [vmem:[%s258 + $0x98] sm:$0xff]
        %v484 = vld [vmem:[%s258 + $0xa0] sm:$0xff]
        %v485 = vld [vmem:[%s258 + $0xa8] sm:$0xff]
        %v486 = vld [vmem:[%s258 + $0xb0] sm:$0xff]
        %v487 = vld [vmem:[%s258 + $0xb8] sm:$0xff]
        %v488 = vld [vmem:[%s258 + $0xc0] sm:$0xff]
        %v489 = vld [vmem:[%s258 + $0xc8] sm:$0xff]
        %v490 = vld [vmem:[%s258 + $0xd0] sm:$0xff]
        %v491 = vld [vmem:[%s258 + $0xd8] sm:$0xff]
        %v492 = vld [vmem:[%s258 + $0xe0] sm:$0xff]
        %v493 = vld [vmem:[%s258 + $0xe8] sm:$0xff]
        %v494 = vld [vmem:[%s258 + $0xf0] sm:$0xff]
        %v495 = vld [vmem:[%s258 + $0xf8] sm:$0xff]
        %v496 = vld [vmem:[%s258 + $0x100] sm:$0xff]
        %v497 = vld [vmem:[%s258 + $0x108] sm:$0xff]
        %v498 = vld [vmem:[%s258 + $0x110] sm:$0xff]
        %v499 = vld [vmem:[%s258 + $0x118] sm:$0xff]
        %v500 = vld [vmem:[%s258 + $0x120] sm:$0xff]
        %v501 = vld [vmem:[%s258 + $0x128] sm:$0xff]
        %v502 = vld [vmem:[%s258 + $0x130] sm:$0xff]
        %v503 = vld [vmem:[%s258 + $0x138] sm:$0xff]
        %v504 = vld [vmem:[%s258 + $0x140] sm:$0xff]
        %v505 = vld [vmem:[%s258 + $0x148] sm:$0xff]
        %v506 = vld [vmem:[%s258 + $0x150] sm:$0xff]
        %v507 = vld [vmem:[%s258 + $0x158] sm:$0xff]
        %v508 = vld [vmem:[%s258 + $0x160] sm:$0xff]
        %v509 = vld [vmem:[%s258 + $0x168] sm:$0xff]
        %v510 = vld [vmem:[%s258 + $0x170] sm:$0xff]
        %v511 = vld [vmem:[%s258 + $0x178] sm:$0xff]
        %v512 = vld [vmem:[%s258 + $0x180] sm:$0xff]
        %v513 = vld [vmem:[%s258 + $0x188] sm:$0xff]
        %v514 = vld [vmem:[%s258 + $0x190] sm:$0xff]
        %v515 = vld [vmem:[%s258 + $0x198] sm:$0xff]
        %v516 = vld [vmem:[%s258 + $0x1a0] sm:$0xff]
        %v517 = vld [vmem:[%s258 + $0x1a8] sm:$0xff]
        %v518 = vld [vmem:[%s258 + $0x1b0] sm:$0xff]
        %v519 = vld [vmem:[%s258 + $0x1b8] sm:$0xff]
        %v520 = vld [vmem:[%s258 + $0x1c0] sm:$0xff]
        %v521 = vld [vmem:[%s258 + $0x1c8] sm:$0xff]
        %v522 = vld [vmem:[%s258 + $0x1d0] sm:$0xff]
        %v523 = vld [vmem:[%s258 + $0x1d8] sm:$0xff]
        %v524 = vld [vmem:[%s258 + $0x1e0] sm:$0xff]
        %v525 = vld [vmem:[%s258 + $0x1e8] sm:$0xff]
        %v526 = vld [vmem:[%s258 + $0x1f0] sm:$0xff]
        %v527 = vld [vmem:[%s258 + $0x1f8] sm:$0xff]
        %v528 = vld [vmem:[#allocation3] ss:$8 sm:$0xf]
        %529 = vmatpush.msra.mxu0 %v524
        %530 = vmatpush.msra.mxu0 %v520
        %531 = vmatpush.msra.mxu0 %v516
        %532 = vmatpush.msra.mxu0 %v512
        %533 = vmatpush.msra.mxu0 %v508
        %534 = vmatpush.msra.mxu0 %v504
        %535 = vmatpush.msra.mxu0 %v500
        %536 = vmatpush.msra.mxu0 %v496
        %537 = vmatpush.msra.mxu0 %v492
        %538 = vmatpush.msra.mxu0 %v488
        %539 = vmatpush.msra.mxu0 %v484
        %540 = vmatpush.msra.mxu0 %v480
        %541 = vmatpush.msra.mxu0 %v476
        %542 = vmatpush.msra.mxu0 %v472
        %543 = vmatpush.msra.mxu0 %v468
        %544 = vmatpush.msra.mxu0 %v464
        %545 = vmatmul.f32.gmra.mxu0 0.0
        %v546 = vpop.f32.mrf.mxu0
        %v547 = vadd.f32 0.0, %v546
        %548 = vdwg.mxu0
        %549 = vmatpush.msra.mxu0 %v525
        %550 = vmatpush.msra.mxu0 %v521
        %551 = vmatpush.msra.mxu0 %v517
        %552 = vmatpush.msra.mxu0 %v513
        %553 = vmatpush.msra.mxu0 %v509
        %554 = vmatpush.msra.mxu0 %v505
        %555 = vmatpush.msra.mxu0 %v501
        %556 = vmatpush.msra.mxu0 %v497
        %557 = vmatpush.msra.mxu0 %v493
        %558 = vmatpush.msra.mxu0 %v489
        %559 = vmatpush.msra.mxu0 %v485
        %560 = vmatpush.msra.mxu0 %v481
        %561 = vmatpush.msra.mxu0 %v477
        %562 = vmatpush.msra.mxu0 %v473
        %563 = vmatpush.msra.mxu0 %v469
        %564 = vmatpush.msra.mxu0 %v465
        %565 = vmatmul.f32.gmra.mxu0 0.0
        %v566 = vpop.f32.mrf.mxu0
        %v567 = vadd.f32 0.0, %v566
        %568 = vdwg.mxu0
        %569 = vmatpush.msra.mxu0 %v526
        %570 = vmatpush.msra.mxu0 %v522
        %571 = vmatpush.msra.mxu0 %v518
        %572 = vmatpush.msra.mxu0 %v514
        %573 = vmatpush.msra.mxu0 %v510
        %574 = vmatpush.msra.mxu0 %v506
        %575 = vmatpush.msra.mxu0 %v502
        %576 = vmatpush.msra.mxu0 %v498
        %577 = vmatpush.msra.mxu0 %v494
        %578 = vmatpush.msra.mxu0 %v490
        %579 = vmatpush.msra.mxu0 %v486
        %580 = vmatpush.msra.mxu0 %v482
        %581 = vmatpush.msra.mxu0 %v478
        %582 = vmatpush.msra.mxu0 %v474
        %583 = vmatpush.msra.mxu0 %v470
        %584 = vmatpush.msra.mxu0 %v466
        %585 = vmatmul.f32.gmra.mxu0 0.0
        %v586 = vpop.f32.mrf.mxu0
        %v587 = vadd.f32 0.0, %v586
        %588 = vdwg.mxu0
        %589 = vmatpush.msra.mxu0 %v527
        %590 = vmatpush.msra.mxu0 %v523
        %591 = vmatpush.msra.mxu0 %v519
        %592 = vmatpush.msra.mxu0 %v515
        %593 = vmatpush.msra.mxu0 %v511
        %594 = vmatpush.msra.mxu0 %v507
        %595 = vmatpush.msra.mxu0 %v503
        %596 = vmatpush.msra.mxu0 %v499
        %597 = vmatpush.msra.mxu0 %v495
        %598 = vmatpush.msra.mxu0 %v491
        %599 = vmatpush.msra.mxu0 %v487
        %600 = vmatpush.msra.mxu0 %v483
        %601 = vmatpush.msra.mxu0 %v479
        %602 = vmatpush.msra.mxu0 %v475
        %603 = vmatpush.msra.mxu0 %v471
        %604 = vmatpush.msra.mxu0 %v467
        %605 = vmatmul.f32.gmra.mxu0 0.0
        %v606 = vpop.f32.mrf.mxu0
        %v607 = vadd.f32 0.0, %v606
        %608 = vdwg.mxu0
        %v613 = vrot.slane %v567, 7
        %v614 = vrot.slane %v587, 6
        %v615 = vrot.slane %v607, 5
        %vm616 = vcmask 1040384
        %v617 = vsel %vm616, %v547, %v613
        %vm618 = vcmask 1042434
        %v619 = vsel %vm618, %v614, %v615
        %vm620 = vcmask 1041408
        %v621 = vsel %vm620, %v617, %v619
        %v623 = vadd.f32 %v528, %v621
        %v624 = vxor.u32 %v623, 2147483648
        %v625 = vmul.f32 %v624, 1.442695
        %v626 = vpow.pop %v625
        %v627 = vadd.f32 %v626, 1.0
        %v628 = vrcp.pop %v627
        %v629 = vmul.f32 %v627, %v628
        %v630 = vsub.f32 1.0, %v629
        %v631 = vmul.f32 %v628, %v630
        %v632 = vadd.f32 %v628, %v631
        %vm633 = vweird.f32 %v627
        %vm634 = vweird.f32 %v628
        %vm635 = vmor %vm633, %vm634
        %v636 = vsel %vm635, %v628, %v632
        %v637 = vand.u32 2147483647, %v627
        %vm638 = vcmp.eq.f32.partialorder %v637, 8.507059e+37
        %v639 = vand.u32 %v627, 2147483648
        %v640 = vor.u32 1.1754944e-38, %v639
        %v641 = vsel %vm638, %v640, %v636
        %v642 = vmul.f32 1.0, %v641
        %v644 = vrot.slane %v623, 3
        %v646 = vtanh.pop %v644
        %v648 = vrot.slane %v642, 1
        %v650 = vmul.f32 %v648, 0.0
        %v651 = vmul.f32 %v642, %v646
        %v652 = vadd.f32 %v650, %v651
        %v653 = vtanh.pop %v652
        %v654 = vrot.slane %v642, 2
        %v656 = vmul.f32 %v654, %v653
        %657 = vst [vmem:[#allocation2] sm:$0x1] %v656
        %s658 = scalar_lea.vmem [#allocation3], 1
        %v659 = vld [vmem:[%s658] ss:$8 sm:$0xf]
        %660 = vmatpush.msra.mxu0 %v524
        %661 = vmatpush.msra.mxu0 %v520
        %662 = vmatpush.msra.mxu0 %v516
        %663 = vmatpush.msra.mxu0 %v512
        %664 = vmatpush.msra.mxu0 %v508
        %665 = vmatpush.msra.mxu0 %v504
        %666 = vmatpush.msra.mxu0 %v500
        %667 = vmatpush.msra.mxu0 %v496
        %668 = vmatpush.msra.mxu0 %v492
        %669 = vmatpush.msra.mxu0 %v488
        %670 = vmatpush.msra.mxu0 %v484
        %671 = vmatpush.msra.mxu0 %v480
        %672 = vmatpush.msra.mxu0 %v476
        %673 = vmatpush.msra.mxu0 %v472
        %674 = vmatpush.msra.mxu0 %v468
        %675 = vmatpush.msra.mxu0 %v464
        %676 = vmatmul.f32.gmra.mxu0 %v656
        %v677 = vpop.f32.mrf.mxu0
        %v678 = vadd.f32 0.0, %v677
        %679 = vdwg.mxu0
        %680 = vmatpush.msra.mxu0 %v525
        %681 = vmatpush.msra.mxu0 %v521
        %682 = vmatpush.msra.mxu0 %v517
        %683 = vmatpush.msra.mxu0 %v513
        %684 = vmatpush.msra.mxu0 %v509
        %685 = vmatpush.msra.mxu0 %v505
        %686 = vmatpush.msra.mxu0 %v501
        %687 = vmatpush.msra.mxu0 %v497
        %688 = vmatpush.msra.mxu0 %v493
        %689 = vmatpush.msra.mxu0 %v489
        %690 = vmatpush.msra.mxu0 %v485
        %691 = vmatpush.msra.mxu0 %v481
        %692 = vmatpush.msra.mxu0 %v477
        %693 = vmatpush.msra.mxu0 %v473
        %694 = vmatpush.msra.mxu0 %v469
        %695 = vmatpush.msra.mxu0 %v465
        %696 = vmatmul.f32.gmra.mxu0 %v656
        %v697 = vpop.f32.mrf.mxu0
        %v698 = vadd.f32 0.0, %v697
        %699 = vdwg.mxu0
        %700 = vmatpush.msra.mxu0 %v526
        %701 = vmatpush.msra.mxu0 %v522
        %702 = vmatpush.msra.mxu0 %v518
        %703 = vmatpush.msra.mxu0 %v514
        %704 = vmatpush.msra.mxu0 %v510
        %705 = vmatpush.msra.mxu0 %v506
        %706 = vmatpush.msra.mxu0 %v502
        %707 = vmatpush.msra.mxu0 %v498
        %708 = vmatpush.msra.mxu0 %v494
        %709 = vmatpush.msra.mxu0 %v490
        %710 = vmatpush.msra.mxu0 %v486
        %711 = vmatpush.msra.mxu0 %v482
        %712 = vmatpush.msra.mxu0 %v478
        %713 = vmatpush.msra.mxu0 %v474
        %714 = vmatpush.msra.mxu0 %v470
        %715 = vmatpush.msra.mxu0 %v466
        %716 = vmatmul.f32.gmra.mxu0 %v656
        %v717 = vpop.f32.mrf.mxu0
        %v718 = vadd.f32 0.0, %v717
        %719 = vdwg.mxu0
        %720 = vmatpush.msra.mxu0 %v527
        %721 = vmatpush.msra.mxu0 %v523
        %722 = vmatpush.msra.mxu0 %v519
        %723 = vmatpush.msra.mxu0 %v515
        %724 = vmatpush.msra.mxu0 %v511
        %725 = vmatpush.msra.mxu0 %v507
        %726 = vmatpush.msra.mxu0 %v503
        %727 = vmatpush.msra.mxu0 %v499
        %728 = vmatpush.msra.mxu0 %v495
        %729 = vmatpush.msra.mxu0 %v491
        %730 = vmatpush.msra.mxu0 %v487
        %731 = vmatpush.msra.mxu0 %v483
        %732 = vmatpush.msra.mxu0 %v479
        %733 = vmatpush.msra.mxu0 %v475
        %734 = vmatpush.msra.mxu0 %v471
        %735 = vmatpush.msra.mxu0 %v467
        %736 = vmatmul.f32.gmra.mxu0 %v656
        %v737 = vpop.f32.mrf.mxu0
        %v738 = vadd.f32 0.0, %v737
        %739 = vdwg.mxu0
        %v744 = vrot.slane %v698, 7
        %v745 = vrot.slane %v718, 6
        %v746 = vrot.slane %v738, 5
        %v747 = vsel %vm616, %v678, %v744
        %v748 = vsel %vm618, %v745, %v746
        %v749 = vsel %vm620, %v747, %v748
        %v751 = vadd.f32 %v659, %v749
        %v752 = vxor.u32 %v751, 2147483648
        %v753 = vmul.f32 %v752, 1.442695
        %v754 = vpow.pop %v753
        %v755 = vadd.f32 %v754, 1.0
        %v756 = vrcp.pop %v755
        %v757 = vmul.f32 %v755, %v756
        %v758 = vsub.f32 1.0, %v757
        %v759 = vmul.f32 %v756, %v758
        %v760 = vadd.f32 %v756, %v759
        %vm761 = vweird.f32 %v755
        %vm762 = vweird.f32 %v756
        %vm763 = vmor %vm761, %vm762
        %v764 = vsel %vm763, %v756, %v760
        %v765 = vand.u32 2147483647, %v755
        %vm766 = vcmp.eq.f32.partialorder %v765, 8.507059e+37
        %v767 = vand.u32 %v755, 2147483648
        %v768 = vor.u32 1.1754944e-38, %v767
        %v769 = vsel %vm766, %v768, %v764
        %v770 = vmul.f32 1.0, %v769
        %v772 = vrot.slane %v751, 3
        %v774 = vtanh.pop %v772
        %v776 = vrot.slane %v770, 1
        %v778 = vmul.f32 %v776, %v652
        %v779 = vmul.f32 %v770, %v774
        %v780 = vadd.f32 %v778, %v779
        %v781 = vtanh.pop %v780
        %v782 = vrot.slane %v770, 2
        %v784 = vmul.f32 %v782, %v781
        %785 = vst [vmem:[#allocation2 + $0x1] sm:$0x1] %v784
        %s786 = scalar_lea.vmem [#allocation3], 2
        %v787 = vld [vmem:[%s786] ss:$8 sm:$0xf]
        %788 = vmatpush.msra.mxu0 %v524
        %789 = vmatpush.msra.mxu0 %v520
        %790 = vmatpush.msra.mxu0 %v516
        %791 = vmatpush.msra.mxu0 %v512
        %792 = vmatpush.msra.mxu0 %v508
        %793 = vmatpush.msra.mxu0 %v504
        %794 = vmatpush.msra.mxu0 %v500
        %795 = vmatpush.msra.mxu0 %v496
        %796 = vmatpush.msra.mxu0 %v492
        %797 = vmatpush.msra.mxu0 %v488
        %798 = vmatpush.msra.mxu0 %v484
        %799 = vmatpush.msra.mxu0 %v480
        %800 = vmatpush.msra.mxu0 %v476
        %801 = vmatpush.msra.mxu0 %v472
        %802 = vmatpush.msra.mxu0 %v468
        %803 = vmatpush.msra.mxu0 %v464
        %804 = vmatmul.f32.gmra.mxu0 %v784
        %v805 = vpop.f32.mrf.mxu0
        %v806 = vadd.f32 0.0, %v805
        %807 = vdwg.mxu0
        %808 = vmatpush.msra.mxu0 %v525
        %809 = vmatpush.msra.mxu0 %v521
        %810 = vmatpush.msra.mxu0 %v517
        %811 = vmatpush.msra.mxu0 %v513
        %812 = vmatpush.msra.mxu0 %v509
        %813 = vmatpush.msra.mxu0 %v505
        %814 = vmatpush.msra.mxu0 %v501
        %815 = vmatpush.msra.mxu0 %v497
        %816 = vmatpush.msra.mxu0 %v493
        %817 = vmatpush.msra.mxu0 %v489
        %818 = vmatpush.msra.mxu0 %v485
        %819 = vmatpush.msra.mxu0 %v481
        %820 = vmatpush.msra.mxu0 %v477
        %821 = vmatpush.msra.mxu0 %v473
        %822 = vmatpush.msra.mxu0 %v469
        %823 = vmatpush.msra.mxu0 %v465
        %824 = vmatmul.f32.gmra.mxu0 %v784
        %v825 = vpop.f32.mrf.mxu0
        %v826 = vadd.f32 0.0, %v825
        %827 = vdwg.mxu0
        %828 = vmatpush.msra.mxu0 %v526
        %829 = vmatpush.msra.mxu0 %v522
        %830 = vmatpush.msra.mxu0 %v518
        %831 = vmatpush.msra.mxu0 %v514
        %832 = vmatpush.msra.mxu0 %v510
        %833 = vmatpush.msra.mxu0 %v506
        %834 = vmatpush.msra.mxu0 %v502
        %835 = vmatpush.msra.mxu0 %v498
        %836 = vmatpush.msra.mxu0 %v494
        %837 = vmatpush.msra.mxu0 %v490
        %838 = vmatpush.msra.mxu0 %v486
        %839 = vmatpush.msra.mxu0 %v482
        %840 = vmatpush.msra.mxu0 %v478
        %841 = vmatpush.msra.mxu0 %v474
        %842 = vmatpush.msra.mxu0 %v470
        %843 = vmatpush.msra.mxu0 %v466
        %844 = vmatmul.f32.gmra.mxu0 %v784
        %v845 = vpop.f32.mrf.mxu0
        %v846 = vadd.f32 0.0, %v845
        %847 = vdwg.mxu0
        %848 = vmatpush.msra.mxu0 %v527
        %849 = vmatpush.msra.mxu0 %v523
        %850 = vmatpush.msra.mxu0 %v519
        %851 = vmatpush.msra.mxu0 %v515
        %852 = vmatpush.msra.mxu0 %v511
        %853 = vmatpush.msra.mxu0 %v507
        %854 = vmatpush.msra.mxu0 %v503
        %855 = vmatpush.msra.mxu0 %v499
        %856 = vmatpush.msra.mxu0 %v495
        %857 = vmatpush.msra.mxu0 %v491
        %858 = vmatpush.msra.mxu0 %v487
        %859 = vmatpush.msra.mxu0 %v483
        %860 = vmatpush.msra.mxu0 %v479
        %861 = vmatpush.msra.mxu0 %v475
        %862 = vmatpush.msra.mxu0 %v471
        %863 = vmatpush.msra.mxu0 %v467
        %864 = vmatmul.f32.gmra.mxu0 %v784
        %v865 = vpop.f32.mrf.mxu0
        %v866 = vadd.f32 0.0, %v865
        %867 = vdwg.mxu0
        %v872 = vrot.slane %v826, 7
        %v873 = vrot.slane %v846, 6
        %v874 = vrot.slane %v866, 5
        %v875 = vsel %vm616, %v806, %v872
        %v876 = vsel %vm618, %v873, %v874
        %v877 = vsel %vm620, %v875, %v876
        %v879 = vadd.f32 %v787, %v877
        %v880 = vxor.u32 %v879, 2147483648
        %v881 = vmul.f32 %v880, 1.442695
        %v882 = vpow.pop %v881
        %v883 = vadd.f32 %v882, 1.0
        %v884 = vrcp.pop %v883
        %v885 = vmul.f32 %v883, %v884
        %v886 = vsub.f32 1.0, %v885
        %v887 = vmul.f32 %v884, %v886
        %v888 = vadd.f32 %v884, %v887
        %vm889 = vweird.f32 %v883
        %vm890 = vweird.f32 %v884
        %vm891 = vmor %vm889, %vm890
        %v892 = vsel %vm891, %v884, %v888
        %v893 = vand.u32 2147483647, %v883
        %vm894 = vcmp.eq.f32.partialorder %v893, 8.507059e+37
        %v895 = vand.u32 %v883, 2147483648
        %v896 = vor.u32 1.1754944e-38, %v895
        %v897 = vsel %vm894, %v896, %v892
        %v898 = vmul.f32 1.0, %v897
        %v900 = vrot.slane %v879, 3
        %v902 = vtanh.pop %v900
        %v904 = vrot.slane %v898, 1
        %v906 = vmul.f32 %v904, %v780
        %v907 = vmul.f32 %v898, %v902
        %v908 = vadd.f32 %v906, %v907
        %v909 = vtanh.pop %v908
        %v910 = vrot.slane %v898, 2
        %v912 = vmul.f32 %v910, %v909
        %913 = vst [vmem:[#allocation2 + $0x2] sm:$0x1] %v912
        %s914 = scalar_lea.vmem [#allocation3], 3
        %v915 = vld [vmem:[%s914] ss:$8 sm:$0xf]
        %916 = vmatpush.msra.mxu0 %v524
        %917 = vmatpush.msra.mxu0 %v520
        %918 = vmatpush.msra.mxu0 %v516
        %919 = vmatpush.msra.mxu0 %v512
        %920 = vmatpush.msra.mxu0 %v508
        %921 = vmatpush.msra.mxu0 %v504
        %922 = vmatpush.msra.mxu0 %v500
        %923 = vmatpush.msra.mxu0 %v496
        %924 = vmatpush.msra.mxu0 %v492
        %925 = vmatpush.msra.mxu0 %v488
        %926 = vmatpush.msra.mxu0 %v484
        %927 = vmatpush.msra.mxu0 %v480
        %928 = vmatpush.msra.mxu0 %v476
        %929 = vmatpush.msra.mxu0 %v472
        %930 = vmatpush.msra.mxu0 %v468
        %931 = vmatpush.msra.mxu0 %v464
        %932 = vmatmul.f32.gmra.mxu0 %v912
        %v933 = vpop.f32.mrf.mxu0
        %v934 = vadd.f32 0.0, %v933
        %935 = vdwg.mxu0
        %936 = vmatpush.msra.mxu0 %v525
        %937 = vmatpush.msra.mxu0 %v521
        %938 = vmatpush.msra.mxu0 %v517
        %939 = vmatpush.msra.mxu0 %v513
        %940 = vmatpush.msra.mxu0 %v509
        %941 = vmatpush.msra.mxu0 %v505
        %942 = vmatpush.msra.mxu0 %v501
        %943 = vmatpush.msra.mxu0 %v497
        %944 = vmatpush.msra.mxu0 %v493
        %945 = vmatpush.msra.mxu0 %v489
        %946 = vmatpush.msra.mxu0 %v485
        %947 = vmatpush.msra.mxu0 %v481
        %948 = vmatpush.msra.mxu0 %v477
        %949 = vmatpush.msra.mxu0 %v473
        %950 = vmatpush.msra.mxu0 %v469
        %951 = vmatpush.msra.mxu0 %v465
        %952 = vmatmul.f32.gmra.mxu0 %v912
        %v953 = vpop.f32.mrf.mxu0
        %v954 = vadd.f32 0.0, %v953
        %955 = vdwg.mxu0
        %956 = vmatpush.msra.mxu0 %v526
        %957 = vmatpush.msra.mxu0 %v522
        %958 = vmatpush.msra.mxu0 %v518
        %959 = vmatpush.msra.mxu0 %v514
        %960 = vmatpush.msra.mxu0 %v510
        %961 = vmatpush.msra.mxu0 %v506
        %962 = vmatpush.msra.mxu0 %v502
        %963 = vmatpush.msra.mxu0 %v498
        %964 = vmatpush.msra.mxu0 %v494
        %965 = vmatpush.msra.mxu0 %v490
        %966 = vmatpush.msra.mxu0 %v486
        %967 = vmatpush.msra.mxu0 %v482
        %968 = vmatpush.msra.mxu0 %v478
        %969 = vmatpush.msra.mxu0 %v474
        %970 = vmatpush.msra.mxu0 %v470
        %971 = vmatpush.msra.mxu0 %v466
        %972 = vmatmul.f32.gmra.mxu0 %v912
        %v973 = vpop.f32.mrf.mxu0
        %v974 = vadd.f32 0.0, %v973
        %975 = vdwg.mxu0
        %976 = vmatpush.msra.mxu0 %v527
        %977 = vmatpush.msra.mxu0 %v523
        %978 = vmatpush.msra.mxu0 %v519
        %979 = vmatpush.msra.mxu0 %v515
        %980 = vmatpush.msra.mxu0 %v511
        %981 = vmatpush.msra.mxu0 %v507
        %982 = vmatpush.msra.mxu0 %v503
        %983 = vmatpush.msra.mxu0 %v499
        %984 = vmatpush.msra.mxu0 %v495
        %985 = vmatpush.msra.mxu0 %v491
        %986 = vmatpush.msra.mxu0 %v487
        %987 = vmatpush.msra.mxu0 %v483
        %988 = vmatpush.msra.mxu0 %v479
        %989 = vmatpush.msra.mxu0 %v475
        %990 = vmatpush.msra.mxu0 %v471
        %991 = vmatpush.msra.mxu0 %v467
        %992 = vmatmul.f32.gmra.mxu0 %v912
        %v993 = vpop.f32.mrf.mxu0
        %v994 = vadd.f32 0.0, %v993
        %995 = vdwg.mxu0
        %v1000 = vrot.slane %v954, 7
        %v1001 = vrot.slane %v974, 6
        %v1002 = vrot.slane %v994, 5
        %v1003 = vsel %vm616, %v934, %v1000
        %v1004 = vsel %vm618, %v1001, %v1002
        %v1005 = vsel %vm620, %v1003, %v1004
        %v1007 = vadd.f32 %v915, %v1005
        %v1008 = vxor.u32 %v1007, 2147483648
        %v1009 = vmul.f32 %v1008, 1.442695
        %v1010 = vpow.pop %v1009
        %v1011 = vadd.f32 %v1010, 1.0
        %v1012 = vrcp.pop %v1011
        %v1013 = vmul.f32 %v1011, %v1012
        %v1014 = vsub.f32 1.0, %v1013
        %v1015 = vmul.f32 %v1012, %v1014
        %v1016 = vadd.f32 %v1012, %v1015
        %vm1017 = vweird.f32 %v1011
        %vm1018 = vweird.f32 %v1012
        %vm1019 = vmor %vm1017, %vm1018
        %v1020 = vsel %vm1019, %v1012, %v1016
        %v1021 = vand.u32 2147483647, %v1011
        %vm1022 = vcmp.eq.f32.partialorder %v1021, 8.507059e+37
        %v1023 = vand.u32 %v1011, 2147483648
        %v1024 = vor.u32 1.1754944e-38, %v1023
        %v1025 = vsel %vm1022, %v1024, %v1020
        %v1026 = vmul.f32 1.0, %v1025
        %v1028 = vrot.slane %v1007, 3
        %v1030 = vtanh.pop %v1028
        %v1032 = vrot.slane %v1026, 1
        %v1034 = vmul.f32 %v1032, %v908
        %v1035 = vmul.f32 %v1026, %v1030
        %v1036 = vadd.f32 %v1034, %v1035
        %v1037 = vtanh.pop %v1036
        %v1038 = vrot.slane %v1026, 2
        %v1040 = vmul.f32 %v1038, %v1037
        %1041 = vst [vmem:[#allocation2 + $0x3] sm:$0x1] %v1040
        %s1042 = scalar_lea.vmem [#allocation3], 4
        %v1043 = vld [vmem:[%s1042] ss:$8 sm:$0xf]
        %1044 = vmatpush.msra.mxu0 %v524
        %1045 = vmatpush.msra.mxu0 %v520
        %1046 = vmatpush.msra.mxu0 %v516
        %1047 = vmatpush.msra.mxu0 %v512
        %1048 = vmatpush.msra.mxu0 %v508
        %1049 = vmatpush.msra.mxu0 %v504
        %1050 = vmatpush.msra.mxu0 %v500
        %1051 = vmatpush.msra.mxu0 %v496
        %1052 = vmatpush.msra.mxu0 %v492
        %1053 = vmatpush.msra.mxu0 %v488
        %1054 = vmatpush.msra.mxu0 %v484
        %1055 = vmatpush.msra.mxu0 %v480
        %1056 = vmatpush.msra.mxu0 %v476
        %1057 = vmatpush.msra.mxu0 %v472
        %1058 = vmatpush.msra.mxu0 %v468
        %1059 = vmatpush.msra.mxu0 %v464
        %1060 = vmatmul.f32.gmra.mxu0 %v1040
        %v1061 = vpop.f32.mrf.mxu0
        %v1062 = vadd.f32 0.0, %v1061
        %1063 = vdwg.mxu0
        %1064 = vmatpush.msra.mxu0 %v525
        %1065 = vmatpush.msra.mxu0 %v521
        %1066 = vmatpush.msra.mxu0 %v517
        %1067 = vmatpush.msra.mxu0 %v513
        %1068 = vmatpush.msra.mxu0 %v509
        %1069 = vmatpush.msra.mxu0 %v505
        %1070 = vmatpush.msra.mxu0 %v501
        %1071 = vmatpush.msra.mxu0 %v497
        %1072 = vmatpush.msra.mxu0 %v493
        %1073 = vmatpush.msra.mxu0 %v489
        %1074 = vmatpush.msra.mxu0 %v485
        %1075 = vmatpush.msra.mxu0 %v481
        %1076 = vmatpush.msra.mxu0 %v477
        %1077 = vmatpush.msra.mxu0 %v473
        %1078 = vmatpush.msra.mxu0 %v469
        %1079 = vmatpush.msra.mxu0 %v465
        %1080 = vmatmul.f32.gmra.mxu0 %v1040
        %v1081 = vpop.f32.mrf.mxu0
        %v1082 = vadd.f32 0.0, %v1081
        %1083 = vdwg.mxu0
        %1084 = vmatpush.msra.mxu0 %v526
        %1085 = vmatpush.msra.mxu0 %v522
        %1086 = vmatpush.msra.mxu0 %v518
        %1087 = vmatpush.msra.mxu0 %v514
        %1088 = vmatpush.msra.mxu0 %v510
        %1089 = vmatpush.msra.mxu0 %v506
        %1090 = vmatpush.msra.mxu0 %v502
        %1091 = vmatpush.msra.mxu0 %v498
        %1092 = vmatpush.msra.mxu0 %v494
        %1093 = vmatpush.msra.mxu0 %v490
        %1094 = vmatpush.msra.mxu0 %v486
        %1095 = vmatpush.msra.mxu0 %v482
        %1096 = vmatpush.msra.mxu0 %v478
        %1097 = vmatpush.msra.mxu0 %v474
        %1098 = vmatpush.msra.mxu0 %v470
        %1099 = vmatpush.msra.mxu0 %v466
        %1100 = vmatmul.f32.gmra.mxu0 %v1040
        %v1101 = vpop.f32.mrf.mxu0
        %v1102 = vadd.f32 0.0, %v1101
        %1103 = vdwg.mxu0
        %1104 = vmatpush.msra.mxu0 %v527
        %1105 = vmatpush.msra.mxu0 %v523
        %1106 = vmatpush.msra.mxu0 %v519
        %1107 = vmatpush.msra.mxu0 %v515
        %1108 = vmatpush.msra.mxu0 %v511
        %1109 = vmatpush.msra.mxu0 %v507
        %1110 = vmatpush.msra.mxu0 %v503
        %1111 = vmatpush.msra.mxu0 %v499
        %1112 = vmatpush.msra.mxu0 %v495
        %1113 = vmatpush.msra.mxu0 %v491
        %1114 = vmatpush.msra.mxu0 %v487
        %1115 = vmatpush.msra.mxu0 %v483
        %1116 = vmatpush.msra.mxu0 %v479
        %1117 = vmatpush.msra.mxu0 %v475
        %1118 = vmatpush.msra.mxu0 %v471
        %1119 = vmatpush.msra.mxu0 %v467
        %1120 = vmatmul.f32.gmra.mxu0 %v1040
        %v1121 = vpop.f32.mrf.mxu0
        %v1122 = vadd.f32 0.0, %v1121
        %1123 = vdwg.mxu0
        %v1128 = vrot.slane %v1082, 7
        %v1129 = vrot.slane %v1102, 6
        %v1130 = vrot.slane %v1122, 5
        %v1131 = vsel %vm616, %v1062, %v1128
        %v1132 = vsel %vm618, %v1129, %v1130
        %v1133 = vsel %vm620, %v1131, %v1132
        %v1135 = vadd.f32 %v1043, %v1133
        %v1136 = vxor.u32 %v1135, 2147483648
        %v1137 = vmul.f32 %v1136, 1.442695
        %v1138 = vpow.pop %v1137
        %v1139 = vadd.f32 %v1138, 1.0
        %v1140 = vrcp.pop %v1139
        %v1141 = vmul.f32 %v1139, %v1140
        %v1142 = vsub.f32 1.0, %v1141
        %v1143 = vmul.f32 %v1140, %v1142
        %v1144 = vadd.f32 %v1140, %v1143
        %vm1145 = vweird.f32 %v1139
        %vm1146 = vweird.f32 %v1140
        %vm1147 = vmor %vm1145, %vm1146
        %v1148 = vsel %vm1147, %v1140, %v1144
        %v1149 = vand.u32 2147483647, %v1139
        %vm1150 = vcmp.eq.f32.partialorder %v1149, 8.507059e+37
        %v1151 = vand.u32 %v1139, 2147483648
        %v1152 = vor.u32 1.1754944e-38, %v1151
        %v1153 = vsel %vm1150, %v1152, %v1148
        %v1154 = vmul.f32 1.0, %v1153
        %v1156 = vrot.slane %v1135, 3
        %v1158 = vtanh.pop %v1156
        %v1160 = vrot.slane %v1154, 1
        %v1162 = vmul.f32 %v1160, %v1036
        %v1163 = vmul.f32 %v1154, %v1158
        %v1164 = vadd.f32 %v1162, %v1163
        %v1165 = vtanh.pop %v1164
        %v1166 = vrot.slane %v1154, 2
        %v1168 = vmul.f32 %v1166, %v1165
        %1169 = vst [vmem:[#allocation2 + $0x4] sm:$0x1] %v1168
        %s1170 = scalar_lea.vmem [#allocation3], 5
        %v1171 = vld [vmem:[%s1170] ss:$8 sm:$0xf]
        %1172 = vmatpush.msra.mxu0 %v524
        %1173 = vmatpush.msra.mxu0 %v520
        %1174 = vmatpush.msra.mxu0 %v516
        %1175 = vmatpush.msra.mxu0 %v512
        %1176 = vmatpush.msra.mxu0 %v508
        %1177 = vmatpush.msra.mxu0 %v504
        %1178 = vmatpush.msra.mxu0 %v500
        %1179 = vmatpush.msra.mxu0 %v496
        %1180 = vmatpush.msra.mxu0 %v492
        %1181 = vmatpush.msra.mxu0 %v488
        %1182 = vmatpush.msra.mxu0 %v484
        %1183 = vmatpush.msra.mxu0 %v480
        %1184 = vmatpush.msra.mxu0 %v476
        %1185 = vmatpush.msra.mxu0 %v472
        %1186 = vmatpush.msra.mxu0 %v468
        %1187 = vmatpush.msra.mxu0 %v464
        %1188 = vmatmul.f32.gmra.mxu0 %v1168
        %v1189 = vpop.f32.mrf.mxu0
        %v1190 = vadd.f32 0.0, %v1189
        %1191 = vdwg.mxu0
        %1192 = vmatpush.msra.mxu0 %v525
        %1193 = vmatpush.msra.mxu0 %v521
        %1194 = vmatpush.msra.mxu0 %v517
        %1195 = vmatpush.msra.mxu0 %v513
        %1196 = vmatpush.msra.mxu0 %v509
        %1197 = vmatpush.msra.mxu0 %v505
        %1198 = vmatpush.msra.mxu0 %v501
        %1199 = vmatpush.msra.mxu0 %v497
        %1200 = vmatpush.msra.mxu0 %v493
        %1201 = vmatpush.msra.mxu0 %v489
        %1202 = vmatpush.msra.mxu0 %v485
        %1203 = vmatpush.msra.mxu0 %v481
        %1204 = vmatpush.msra.mxu0 %v477
        %1205 = vmatpush.msra.mxu0 %v473
        %1206 = vmatpush.msra.mxu0 %v469
        %1207 = vmatpush.msra.mxu0 %v465
        %1208 = vmatmul.f32.gmra.mxu0 %v1168
        %v1209 = vpop.f32.mrf.mxu0
        %v1210 = vadd.f32 0.0, %v1209
        %1211 = vdwg.mxu0
        %1212 = vmatpush.msra.mxu0 %v526
        %1213 = vmatpush.msra.mxu0 %v522
        %1214 = vmatpush.msra.mxu0 %v518
        %1215 = vmatpush.msra.mxu0 %v514
        %1216 = vmatpush.msra.mxu0 %v510
        %1217 = vmatpush.msra.mxu0 %v506
        %1218 = vmatpush.msra.mxu0 %v502
        %1219 = vmatpush.msra.mxu0 %v498
        %1220 = vmatpush.msra.mxu0 %v494
        %1221 = vmatpush.msra.mxu0 %v490
        %1222 = vmatpush.msra.mxu0 %v486
        %1223 = vmatpush.msra.mxu0 %v482
        %1224 = vmatpush.msra.mxu0 %v478
        %1225 = vmatpush.msra.mxu0 %v474
        %1226 = vmatpush.msra.mxu0 %v470
        %1227 = vmatpush.msra.mxu0 %v466
        %1228 = vmatmul.f32.gmra.mxu0 %v1168
        %v1229 = vpop.f32.mrf.mxu0
        %v1230 = vadd.f32 0.0, %v1229
        %1231 = vdwg.mxu0
        %1232 = vmatpush.msra.mxu0 %v527
        %1233 = vmatpush.msra.mxu0 %v523
        %1234 = vmatpush.msra.mxu0 %v519
        %1235 = vmatpush.msra.mxu0 %v515
        %1236 = vmatpush.msra.mxu0 %v511
        %1237 = vmatpush.msra.mxu0 %v507
        %1238 = vmatpush.msra.mxu0 %v503
        %1239 = vmatpush.msra.mxu0 %v499
        %1240 = vmatpush.msra.mxu0 %v495
        %1241 = vmatpush.msra.mxu0 %v491
        %1242 = vmatpush.msra.mxu0 %v487
        %1243 = vmatpush.msra.mxu0 %v483
        %1244 = vmatpush.msra.mxu0 %v479
        %1245 = vmatpush.msra.mxu0 %v475
        %1246 = vmatpush.msra.mxu0 %v471
        %1247 = vmatpush.msra.mxu0 %v467
        %1248 = vmatmul.f32.gmra.mxu0 %v1168
        %v1249 = vpop.f32.mrf.mxu0
        %v1250 = vadd.f32 0.0, %v1249
        %1251 = vdwg.mxu0
        %v1256 = vrot.slane %v1210, 7
        %v1257 = vrot.slane %v1230, 6
        %v1258 = vrot.slane %v1250, 5
        %v1259 = vsel %vm616, %v1190, %v1256
        %v1260 = vsel %vm618, %v1257, %v1258
        %v1261 = vsel %vm620, %v1259, %v1260
        %v1263 = vadd.f32 %v1171, %v1261
        %v1264 = vxor.u32 %v1263, 2147483648
        %v1265 = vmul.f32 %v1264, 1.442695
        %v1266 = vpow.pop %v1265
        %v1267 = vadd.f32 %v1266, 1.0
        %v1268 = vrcp.pop %v1267
        %v1269 = vmul.f32 %v1267, %v1268
        %v1270 = vsub.f32 1.0, %v1269
        %v1271 = vmul.f32 %v1268, %v1270
        %v1272 = vadd.f32 %v1268, %v1271
        %vm1273 = vweird.f32 %v1267
        %vm1274 = vweird.f32 %v1268
        %vm1275 = vmor %vm1273, %vm1274
        %v1276 = vsel %vm1275, %v1268, %v1272
        %v1277 = vand.u32 2147483647, %v1267
        %vm1278 = vcmp.eq.f32.partialorder %v1277, 8.507059e+37
        %v1279 = vand.u32 %v1267, 2147483648
        %v1280 = vor.u32 1.1754944e-38, %v1279
        %v1281 = vsel %vm1278, %v1280, %v1276
        %v1282 = vmul.f32 1.0, %v1281
        %v1284 = vrot.slane %v1263, 3
        %v1286 = vtanh.pop %v1284
        %v1288 = vrot.slane %v1282, 1
        %v1290 = vmul.f32 %v1288, %v1164
        %v1291 = vmul.f32 %v1282, %v1286
        %v1292 = vadd.f32 %v1290, %v1291
        %v1293 = vtanh.pop %v1292
        %v1294 = vrot.slane %v1282, 2
        %v1296 = vmul.f32 %v1294, %v1293
        %1297 = vst [vmem:[#allocation2 + $0x5] sm:$0x1] %v1296
        %s1298 = scalar_lea.vmem [#allocation3], 6
        %v1299 = vld [vmem:[%s1298] ss:$8 sm:$0xf]
        %1300 = vmatpush.msra.mxu0 %v524
        %1301 = vmatpush.msra.mxu0 %v520
        %1302 = vmatpush.msra.mxu0 %v516
        %1303 = vmatpush.msra.mxu0 %v512
        %1304 = vmatpush.msra.mxu0 %v508
        %1305 = vmatpush.msra.mxu0 %v504
        %1306 = vmatpush.msra.mxu0 %v500
        %1307 = vmatpush.msra.mxu0 %v496
        %1308 = vmatpush.msra.mxu0 %v492
        %1309 = vmatpush.msra.mxu0 %v488
        %1310 = vmatpush.msra.mxu0 %v484
        %1311 = vmatpush.msra.mxu0 %v480
        %1312 = vmatpush.msra.mxu0 %v476
        %1313 = vmatpush.msra.mxu0 %v472
        %1314 = vmatpush.msra.mxu0 %v468
        %1315 = vmatpush.msra.mxu0 %v464
        %1316 = vmatmul.f32.gmra.mxu0 %v1296
        %v1317 = vpop.f32.mrf.mxu0
        %v1318 = vadd.f32 0.0, %v1317
        %1319 = vdwg.mxu0
        %1320 = vmatpush.msra.mxu0 %v525
        %1321 = vmatpush.msra.mxu0 %v521
        %1322 = vmatpush.msra.mxu0 %v517
        %1323 = vmatpush.msra.mxu0 %v513
        %1324 = vmatpush.msra.mxu0 %v509
        %1325 = vmatpush.msra.mxu0 %v505
        %1326 = vmatpush.msra.mxu0 %v501
        %1327 = vmatpush.msra.mxu0 %v497
        %1328 = vmatpush.msra.mxu0 %v493
        %1329 = vmatpush.msra.mxu0 %v489
        %1330 = vmatpush.msra.mxu0 %v485
        %1331 = vmatpush.msra.mxu0 %v481
        %1332 = vmatpush.msra.mxu0 %v477
        %1333 = vmatpush.msra.mxu0 %v473
        %1334 = vmatpush.msra.mxu0 %v469
        %1335 = vmatpush.msra.mxu0 %v465
        %1336 = vmatmul.f32.gmra.mxu0 %v1296
        %v1337 = vpop.f32.mrf.mxu0
        %v1338 = vadd.f32 0.0, %v1337
        %1339 = vdwg.mxu0
        %1340 = vmatpush.msra.mxu0 %v526
        %1341 = vmatpush.msra.mxu0 %v522
        %1342 = vmatpush.msra.mxu0 %v518
        %1343 = vmatpush.msra.mxu0 %v514
        %1344 = vmatpush.msra.mxu0 %v510
        %1345 = vmatpush.msra.mxu0 %v506
        %1346 = vmatpush.msra.mxu0 %v502
        %1347 = vmatpush.msra.mxu0 %v498
        %1348 = vmatpush.msra.mxu0 %v494
        %1349 = vmatpush.msra.mxu0 %v490
        %1350 = vmatpush.msra.mxu0 %v486
        %1351 = vmatpush.msra.mxu0 %v482
        %1352 = vmatpush.msra.mxu0 %v478
        %1353 = vmatpush.msra.mxu0 %v474
        %1354 = vmatpush.msra.mxu0 %v470
        %1355 = vmatpush.msra.mxu0 %v466
        %1356 = vmatmul.f32.gmra.mxu0 %v1296
        %v1357 = vpop.f32.mrf.mxu0
        %v1358 = vadd.f32 0.0, %v1357
        %1359 = vdwg.mxu0
        %1360 = vmatpush.msra.mxu0 %v527
        %1361 = vmatpush.msra.mxu0 %v523
        %1362 = vmatpush.msra.mxu0 %v519
        %1363 = vmatpush.msra.mxu0 %v515
        %1364 = vmatpush.msra.mxu0 %v511
        %1365 = vmatpush.msra.mxu0 %v507
        %1366 = vmatpush.msra.mxu0 %v503
        %1367 = vmatpush.msra.mxu0 %v499
        %1368 = vmatpush.msra.mxu0 %v495
        %1369 = vmatpush.msra.mxu0 %v491
        %1370 = vmatpush.msra.mxu0 %v487
        %1371 = vmatpush.msra.mxu0 %v483
        %1372 = vmatpush.msra.mxu0 %v479
        %1373 = vmatpush.msra.mxu0 %v475
        %1374 = vmatpush.msra.mxu0 %v471
        %1375 = vmatpush.msra.mxu0 %v467
        %1376 = vmatmul.f32.gmra.mxu0 %v1296
        %v1377 = vpop.f32.mrf.mxu0
        %v1378 = vadd.f32 0.0, %v1377
        %1379 = vdwg.mxu0
        %v1384 = vrot.slane %v1338, 7
        %v1385 = vrot.slane %v1358, 6
        %v1386 = vrot.slane %v1378, 5
        %v1387 = vsel %vm616, %v1318, %v1384
        %v1388 = vsel %vm618, %v1385, %v1386
        %v1389 = vsel %vm620, %v1387, %v1388
        %v1391 = vadd.f32 %v1299, %v1389
        %v1392 = vxor.u32 %v1391, 2147483648
        %v1393 = vmul.f32 %v1392, 1.442695
        %v1394 = vpow.pop %v1393
        %v1395 = vadd.f32 %v1394, 1.0
        %v1396 = vrcp.pop %v1395
        %v1397 = vmul.f32 %v1395, %v1396
        %v1398 = vsub.f32 1.0, %v1397
        %v1399 = vmul.f32 %v1396, %v1398
        %v1400 = vadd.f32 %v1396, %v1399
        %vm1401 = vweird.f32 %v1395
        %vm1402 = vweird.f32 %v1396
        %vm1403 = vmor %vm1401, %vm1402
        %v1404 = vsel %vm1403, %v1396, %v1400
        %v1405 = vand.u32 2147483647, %v1395
        %vm1406 = vcmp.eq.f32.partialorder %v1405, 8.507059e+37
        %v1407 = vand.u32 %v1395, 2147483648
        %v1408 = vor.u32 1.1754944e-38, %v1407
        %v1409 = vsel %vm1406, %v1408, %v1404
        %v1410 = vmul.f32 1.0, %v1409
        %v1412 = vrot.slane %v1391, 3
        %v1414 = vtanh.pop %v1412
        %v1416 = vrot.slane %v1410, 1
        %v1418 = vmul.f32 %v1416, %v1292
        %v1419 = vmul.f32 %v1410, %v1414
        %v1420 = vadd.f32 %v1418, %v1419
        %v1421 = vtanh.pop %v1420
        %v1422 = vrot.slane %v1410, 2
        %v1424 = vmul.f32 %v1422, %v1421
        %1425 = vst [vmem:[#allocation2 + $0x6] sm:$0x1] %v1424
        %s1426 = scalar_lea.vmem [#allocation3], 7
        %v1427 = vld [vmem:[%s1426] ss:$8 sm:$0xf]
        %1428 = vmatpush.msra.mxu0 %v524
        %1429 = vmatpush.msra.mxu0 %v520
        %1430 = vmatpush.msra.mxu0 %v516
        %1431 = vmatpush.msra.mxu0 %v512
        %1432 = vmatpush.msra.mxu0 %v508
        %1433 = vmatpush.msra.mxu0 %v504
        %1434 = vmatpush.msra.mxu0 %v500
        %1435 = vmatpush.msra.mxu0 %v496
        %1436 = vmatpush.msra.mxu0 %v492
        %1437 = vmatpush.msra.mxu0 %v488
        %1438 = vmatpush.msra.mxu0 %v484
        %1439 = vmatpush.msra.mxu0 %v480
        %1440 = vmatpush.msra.mxu0 %v476
        %1441 = vmatpush.msra.mxu0 %v472
        %1442 = vmatpush.msra.mxu0 %v468
        %1443 = vmatpush.msra.mxu0 %v464
        %1444 = vmatmul.f32.gmra.mxu0 %v1424
        %v1445 = vpop.f32.mrf.mxu0
        %v1446 = vadd.f32 0.0, %v1445
        %1447 = vdwg.mxu0
        %1448 = vmatpush.msra.mxu0 %v525
        %1449 = vmatpush.msra.mxu0 %v521
        %1450 = vmatpush.msra.mxu0 %v517
        %1451 = vmatpush.msra.mxu0 %v513
        %1452 = vmatpush.msra.mxu0 %v509
        %1453 = vmatpush.msra.mxu0 %v505
        %1454 = vmatpush.msra.mxu0 %v501
        %1455 = vmatpush.msra.mxu0 %v497
        %1456 = vmatpush.msra.mxu0 %v493
        %1457 = vmatpush.msra.mxu0 %v489
        %1458 = vmatpush.msra.mxu0 %v485
        %1459 = vmatpush.msra.mxu0 %v481
        %1460 = vmatpush.msra.mxu0 %v477
        %1461 = vmatpush.msra.mxu0 %v473
        %1462 = vmatpush.msra.mxu0 %v469
        %1463 = vmatpush.msra.mxu0 %v465
        %1464 = vmatmul.f32.gmra.mxu0 %v1424
        %v1465 = vpop.f32.mrf.mxu0
        %v1466 = vadd.f32 0.0, %v1465
        %1467 = vdwg.mxu0
        %1468 = vmatpush.msra.mxu0 %v526
        %1469 = vmatpush.msra.mxu0 %v522
        %1470 = vmatpush.msra.mxu0 %v518
        %1471 = vmatpush.msra.mxu0 %v514
        %1472 = vmatpush.msra.mxu0 %v510
        %1473 = vmatpush.msra.mxu0 %v506
        %1474 = vmatpush.msra.mxu0 %v502
        %1475 = vmatpush.msra.mxu0 %v498
        %1476 = vmatpush.msra.mxu0 %v494
        %1477 = vmatpush.msra.mxu0 %v490
        %1478 = vmatpush.msra.mxu0 %v486
        %1479 = vmatpush.msra.mxu0 %v482
        %1480 = vmatpush.msra.mxu0 %v478
        %1481 = vmatpush.msra.mxu0 %v474
        %1482 = vmatpush.msra.mxu0 %v470
        %1483 = vmatpush.msra.mxu0 %v466
        %1484 = vmatmul.f32.gmra.mxu0 %v1424
        %v1485 = vpop.f32.mrf.mxu0
        %v1486 = vadd.f32 0.0, %v1485
        %1487 = vdwg.mxu0
        %1488 = vmatpush.msra.mxu0 %v527
        %1489 = vmatpush.msra.mxu0 %v523
        %1490 = vmatpush.msra.mxu0 %v519
        %1491 = vmatpush.msra.mxu0 %v515
        %1492 = vmatpush.msra.mxu0 %v511
        %1493 = vmatpush.msra.mxu0 %v507
        %1494 = vmatpush.msra.mxu0 %v503
        %1495 = vmatpush.msra.mxu0 %v499
        %1496 = vmatpush.msra.mxu0 %v495
        %1497 = vmatpush.msra.mxu0 %v491
        %1498 = vmatpush.msra.mxu0 %v487
        %1499 = vmatpush.msra.mxu0 %v483
        %1500 = vmatpush.msra.mxu0 %v479
        %1501 = vmatpush.msra.mxu0 %v475
        %1502 = vmatpush.msra.mxu0 %v471
        %1503 = vmatpush.msra.mxu0 %v467
        %1504 = vmatmul.f32.gmra.mxu0 %v1424
        %v1505 = vpop.f32.mrf.mxu0
        %v1506 = vadd.f32 0.0, %v1505
        %1507 = vdwg.mxu0
        %v1512 = vrot.slane %v1466, 7
        %v1513 = vrot.slane %v1486, 6
        %v1514 = vrot.slane %v1506, 5
        %v1515 = vsel %vm616, %v1446, %v1512
        %v1516 = vsel %vm618, %v1513, %v1514
        %v1517 = vsel %vm620, %v1515, %v1516
        %v1519 = vadd.f32 %v1427, %v1517
        %v1520 = vxor.u32 %v1519, 2147483648
        %v1521 = vmul.f32 %v1520, 1.442695
        %v1522 = vpow.pop %v1521
        %v1523 = vadd.f32 %v1522, 1.0
        %v1524 = vrcp.pop %v1523
        %v1525 = vmul.f32 %v1523, %v1524
        %v1526 = vsub.f32 1.0, %v1525
        %v1527 = vmul.f32 %v1524, %v1526
        %v1528 = vadd.f32 %v1524, %v1527
        %vm1529 = vweird.f32 %v1523
        %vm1530 = vweird.f32 %v1524
        %vm1531 = vmor %vm1529, %vm1530
        %v1532 = vsel %vm1531, %v1524, %v1528
        %v1533 = vand.u32 2147483647, %v1523
        %vm1534 = vcmp.eq.f32.partialorder %v1533, 8.507059e+37
        %v1535 = vand.u32 %v1523, 2147483648
        %v1536 = vor.u32 1.1754944e-38, %v1535
        %v1537 = vsel %vm1534, %v1536, %v1532
        %v1538 = vmul.f32 1.0, %v1537
        %v1540 = vrot.slane %v1519, 3
        %v1542 = vtanh.pop %v1540
        %v1544 = vrot.slane %v1538, 1
        %v1546 = vmul.f32 %v1544, %v1420
        %v1547 = vmul.f32 %v1538, %v1542
        %v1548 = vadd.f32 %v1546, %v1547
        %v1549 = vtanh.pop %v1548
        %v1550 = vrot.slane %v1538, 2
        %v1552 = vmul.f32 %v1550, %v1549
        %1553 = vst [vmem:[#allocation2 + $0x7] sm:$0x1] %v1552
        %p1554 = scmp.eq.s32.totalorder %s23, 1
        // Predicated region
        $region57: #{tpu_custom_call.1} parent=35 // pred_check
          %p1555 = pneg %p1554
        $region58: #{tpu_custom_call.1} parent=35 // pred_check_branch
          %1557 = sbr.rel (%p1555) target = $region60
        $region59: #{tpu_custom_call.1} parent=35 // pred_region
          %v1558 = vld [vmem:[#allocation2] sm:$0xff]
          %1559 = vst [vmem:[#allocation12] sm:$0xff] %v1558
        $region60: #{tpu_custom_call.1} parent=35 // pred_fallthru
          _
        // Predicated region
        $region61: #{tpu_custom_call.1} parent=35 // pred_check
          %p1560 = pneg %p135
        $region62: #{tpu_custom_call.1} parent=35 // pred_check_branch
          %1562 = sbr.rel (%p1560) target = $region64
        $region63: #{tpu_custom_call.1} parent=35 // pred_region
          %1564 = vsyncadd [#allocation6], 0
          %s1566 = sshll.u32 [#allocation12], 4
          %s1567 = int_to_ptr.vmem [resolvable:$true] %s1566
          %s1568 = sshll.u32 %s4, 4
          %s1569 = int_to_ptr.hbm [resolvable:$true] %s1568
          %1571 = dma.vmem_to_hbm [thread:$0]  %s1567, 128, %s1569, [#allocation6]
        $region64: #{tpu_custom_call.1} parent=35 // pred_fallthru
          _
        // Predicated region
        $region65: #{tpu_custom_call.1} parent=35 // pred_check
          %p1572 = pneg %p135
        $region66: #{tpu_custom_call.1} parent=35 // pred_check_branch
          %1574 = sbr.rel (%p1572) target = $region68
        $region67: #{tpu_custom_call.1} parent=35 // pred_region
          %1576 = dma.done [#allocation6], 128
        $region68: #{tpu_custom_call.1} parent=35 // pred_fallthru
          _
      $region36: #{tpu_custom_call.1} parent=5 // pred_fallthru
        _
      %p1577 = scmp.le.s32.totalorder 2, %s18
      // Predicated region
      $region69: #{tpu_custom_call.1} parent=5 // pred_check
        %p1578 = pneg %p1577
      $region70: #{tpu_custom_call.1} parent=5 // pred_check_branch
        %1580 = sbr.rel (%p1578) target = $region72
      $region71: #{tpu_custom_call.1} parent=5 // pred_region
        %s1581 = ssub.s32 %s18, 2
      $region72: #{tpu_custom_call.1} parent=5 // pred_fallthru
        _
    $region6: #{tpu_custom_call.1} parent=1 // loop_footer
      %s22 = sadd.s32 1, %s18
    $region7: #{tpu_custom_call.1} parent=1 // loop_footer_branch
      %17 = sbr.rel target = $region3
    $region8: #{tpu_custom_call.1} parent=1 // loop_exit
      _
    %1582 = vsyncpa [#allocation5], 1
    %s1583 = scalar_lea.sflag [#allocation5], 1
    %1584 = vsyncpa %s1583, 1
    %1585 = vsyncpa [#allocation8], 1
    %s1586 = scalar_lea.sflag [#allocation8], 1
    %1587 = vsyncpa %s1586, 1
    %1588 = vsyncpa [#allocation11], 1
    %s1589 = scalar_lea.sflag [#allocation11], 1
    %1590 = vsyncpa %s1589, 1
    %1591 = vsyncpa [#allocation6], 1
    %s1592 = scalar_lea.sflag [#allocation6], 1
    %1593 = vsyncpa %s1592, 1

</llo_original>
